<compile_context>
chip_gen: v5e
topology: v5e:2x2
jax: 0.10.0
libtpu: 0.0.40
codegen_flags: <defaults>
</compile_context>

<pallas_src>
import math
import functools

import jax
import jax.numpy as jnp
from jax import lax
from jax.experimental import pallas as pl
from jax.experimental.pallas import tpu as pltpu


def attn_kernel(x_ref, wqkv_ref, bqkv_ref, wp_ref, bp_ref, o_ref,
                qkv_scr, y_scr, *, n_head):
    BT, T, C = x_ref.shape
    H = n_head
    D = C // H
    R = BT * T

    # -------- fused QKV projection: one MXU matmul with M = BT*T, N = 3C ----
    # (leading-dim merge (BT, T, C) -> (BT*T, C) is layout-free when T % 8 == 0)
    x2 = x_ref[...].reshape(R, C)                                   # bf16
    qkv = jnp.dot(x2, wqkv_ref[...],
                  preferred_element_type=jnp.float32) + bqkv_ref[...]  # (R, 3C) f32
    # Bulk bf16 cast once; heads read bf16 slices from VMEM scratch.
    # (1/sqrt(D) is already folded into Wq / bq in the wrapper.)
    qkv_scr[...] = qkv.reshape(BT, T, 3 * C).astype(jnp.bfloat16)

    # -------- additive causal bias (finite, diag always unmasked) -----------
    rows = lax.broadcasted_iota(jnp.int32, (T, T), 0)
    cols = lax.broadcasted_iota(jnp.int32, (T, T), 1)
    bias = jnp.where(rows >= cols, jnp.float32(0.0), jnp.float32(-1e30))  # (T, T)

    # -------- per-head attention, batched over the BT elements in the step --
    for hh in range(H):
        q = qkv_scr[:, :, 0 * C + hh * D: 0 * C + (hh + 1) * D]     # (BT, T, D) bf16
        k = qkv_scr[:, :, 1 * C + hh * D: 1 * C + (hh + 1) * D]
        v = qkv_scr[:, :, 2 * C + hh * D: 2 * C + (hh + 1) * D]

        # scores[b, t, s] = sum_d q[b,t,d] * k[b,s,d]  (f32 accumulation)
        att = jnp.einsum('btd,bsd->bts', q, k,
                         preferred_element_type=jnp.float32)         # (BT, T, T)
        att = att + bias[None]

        m = jnp.max(att, axis=-1, keepdims=True)
        e = jnp.exp(att - m)
        p = e * pl.reciprocal(jnp.sum(e, axis=-1, keepdims=True), approx=True)

        yh = jnp.einsum('bts,bsd->btd', p.astype(jnp.bfloat16), v,
                        preferred_element_type=jnp.float32)          # (BT, T, D)
        # Commit this head to VMEM scratch at its lane slice (no concat,
        # no growing vreg live set across heads).
        y_scr[:, :, hh * D:(hh + 1) * D] = yh.astype(jnp.bfloat16)

    # -------- output projection: one MXU matmul with M = BT*T ---------------
    y = jnp.dot(y_scr[...].reshape(R, C), wp_ref[...],
                preferred_element_type=jnp.float32) + bp_ref[...]    # (R, C) f32
    o_ref[...] = y.reshape(BT, T, C).astype(o_ref.dtype)


def _pick_bt(batch, seq, target_rows=256):
    """Batch elements per grid step: BT*T >= target_rows when possible,
    BT divides B, and prefer >= 2 grid steps (v7x megacore) when that still
    leaves >= 128 MXU rows per step."""
    divisors = [d for d in range(1, batch + 1) if batch % d == 0]
    cands = [d for d in divisors if d * seq <= target_rows] or [1]
    bt = max(cands)
    if batch // bt < 2:
        two_step = [d for d in cands if batch // d >= 2 and d * seq >= 128]
        if two_step:
            bt = max(two_step)
    return bt


def _nbytes(shape, dtype):
    n = 1
    for s in shape:
        n *= s
    return n * jnp.dtype(dtype).itemsize


def attention_forward(x, params, n_head):
    """x: (B, T, C) float32. params: dict with 'wqkv','bqkv','wp','bp'."""
    B, T, C = x.shape
    assert C % n_head == 0
    D = C // n_head

    BT = _pick_bt(B, T)
    grid = B // BT

    # Fold 1/sqrt(D) into the q columns of the fused QKV weight/bias (exact:
    # softmax((s*q) k^T) == softmax(s * (q k^T))), then cast weights to bf16.
    scale = 1.0 / math.sqrt(D)
    col_scale = jnp.concatenate([jnp.full((C,), scale, jnp.float32),
                                 jnp.ones((2 * C,), jnp.float32)])
    wqkv = (params['wqkv'].astype(jnp.float32) * col_scale[None, :]).astype(jnp.bfloat16)
    bqkv = (params['bqkv'].astype(jnp.float32) * col_scale[None, :])
    wp = params['wp'].astype(jnp.bfloat16)
    bp = params['bp'].astype(jnp.float32)

    # bf16 activations at the boundary (halves per-step x DMA); output f32.
    xb = x.astype(jnp.bfloat16)

    # ---- VMEM budget: double-buffered inputs/outputs + scratch + headroom ----
    weights = (_nbytes((C, 3 * C), jnp.bfloat16) + _nbytes((1, 3 * C), jnp.float32)
               + _nbytes((C, C), jnp.bfloat16) + _nbytes((1, C), jnp.float32))
    per_step = _nbytes((BT, T, C), jnp.bfloat16) + _nbytes((BT, T, C), x.dtype)
    scratch = (_nbytes((BT, T, 3 * C), jnp.bfloat16)
               + _nbytes((BT, T, C), jnp.bfloat16))
    vmem_bytes = 2 * (weights + per_step) + scratch
    # Note: on v7x (64 MiB physical VMEM) with very large C, single-buffer the
    # constant weight specs (pl.Buffered(1)) or tile the 3C dim instead of
    # raising this limit.
    vmem_limit = max(16 << 20, min(int(vmem_bytes * 1.5) + (2 << 20), 100 << 20))

    def const_spec(shape):
        # Constant index_map: Pallas does not re-DMA the block across the grid.
        return pl.BlockSpec(shape, lambda b: (0,) * len(shape))

    in_specs = [
        pl.BlockSpec((BT, T, C), lambda b: (b, 0, 0)),      # x (BT batch elems/step)
        const_spec((C, 3 * C)), const_spec((1, 3 * C)),     # fused Wqkv, bqkv
        const_spec((C, C)), const_spec((1, C)),             # Wproj, bproj
    ]

    return pl.pallas_call(
        functools.partial(attn_kernel, n_head=n_head),
        out_shape=jax.ShapeDtypeStruct((B, T, C), x.dtype),
        grid_spec=pltpu.PrefetchScalarGridSpec(
            num_scalar_prefetch=0,
            grid=(grid,),
            in_specs=in_specs,
            out_specs=pl.BlockSpec((BT, T, C), lambda b: (b, 0, 0)),
            scratch_shapes=[
                pltpu.VMEM((BT, T, 3 * C), jnp.bfloat16),   # bf16 qkv slab
                pltpu.VMEM((BT, T, C), jnp.bfloat16),       # per-head outputs
            ],
        ),
        compiler_params=pltpu.CompilerParams(
            dimension_semantics=("parallel",),
            vmem_limit_bytes=vmem_limit),
    )(xb, wqkv, bqkv, wp, bp)


def init_params(key, embed_dim):
    C = embed_dim
    ks = jax.random.split(key, 4)
    std = 0.02
    return {
        # Stored transposed (in, out) so the kernel computes x @ W + b.
        'wqkv': jax.random.normal(ks[0], (C, 3 * C), jnp.float32) * std,
        'bqkv': jax.random.normal(ks[1], (1, 3 * C), jnp.float32) * std,
        'wp':   jax.random.normal(ks[2], (C, C), jnp.float32) * std,
        'bp':   jax.random.normal(ks[3], (1, C), jnp.float32) * std,
    }


def reference_forward(x, p, n_head):
    """Pure-JAX (f32) reference mirroring the PyTorch forward in eval mode."""
    B, T, C = x.shape
    H, D = n_head, C // n_head
    qkv = x @ p['wqkv'] + p['bqkv']
    q = qkv[..., 0 * C:1 * C].reshape(B, T, H, D).transpose(0, 2, 1, 3)
    k = qkv[..., 1 * C:2 * C].reshape(B, T, H, D).transpose(0, 2, 1, 3)
    v = qkv[..., 2 * C:3 * C].reshape(B, T, H, D).transpose(0, 2, 1, 3)
    att = (q @ k.transpose(0, 1, 3, 2)) / math.sqrt(D)
    mask = jnp.tril(jnp.ones((T, T), bool))
    att = jnp.where(mask[None, None], att, -jnp.inf)
    att = jax.nn.softmax(att, axis=-1)
    y = (att @ v).transpose(0, 2, 1, 3).reshape(B, T, C)
    return y @ p['wp'] + p['bp']


if __name__ == "__main__":
    # Small shapes consistent with the module (embed_dim % 8 == 0, T <= block_size).
    B, T, C = 2, 8, 32
    n_head = 8
    block_size = 16

    key = jax.random.PRNGKey(0)
    kx, kp = jax.random.split(key)
    x = jax.random.normal(kx, (B, T, C), jnp.float32)
    params = init_params(kp, C)

    out = attention_forward(x, params, n_head)
    out = jax.block_until_ready(out)

    ref = reference_forward(x, params, n_head)
    assert out.shape == (B, T, C)
    # Tolerance accounts for bf16 boundary activations, bf16 MXU operands and
    # the approximate softmax reciprocal.
    assert jnp.allclose(out, ref, atol=2e-2, rtol=5e-2), \
        f"max abs err {jnp.max(jnp.abs(out - ref))}"

    print("KERNEL_OK")
</pallas_src>

<mosaic_0001>
module attributes {stable_mosaic.version = 11 : i64} {
  func.func @attn_kernel(%arg0: i32, %arg1: memref<2x8x32xbf16, #tpu.memory_space<vmem>>, %arg2: memref<32x96xbf16, #tpu.memory_space<vmem>>, %arg3: memref<1x96xf32, #tpu.memory_space<vmem>>, %arg4: memref<32x32xbf16, #tpu.memory_space<vmem>>, %arg5: memref<1x32xf32, #tpu.memory_space<vmem>>, %arg6: memref<2x8x32xf32, #tpu.memory_space<vmem>>, %arg7: memref<2x8x96xbf16, #tpu.memory_space<vmem>>, %arg8: memref<2x8x32xbf16, #tpu.memory_space<vmem>>) attributes {dimension_semantics = [#tpu.dimension_semantics<parallel>], iteration_bounds = array<i64: 1>, scalar_prefetch = 0 : i64, scratch_operands = 2 : i64, tpu.core_type = #tpu.core_type<tc>, window_params = [{transform_indices = @transform_0, window_bounds = array<i64: 2, 8, 32>}, {pipeline_mode = #tpu.pipeline_mode<synchronous>, transform_indices = @transform_1, window_bounds = array<i64: 32, 96>}, {pipeline_mode = #tpu.pipeline_mode<synchronous>, transform_indices = @transform_2, window_bounds = array<i64: 1, 96>}, {pipeline_mode = #tpu.pipeline_mode<synchronous>, transform_indices = @transform_3, window_bounds = array<i64: 32, 32>}, {pipeline_mode = #tpu.pipeline_mode<synchronous>, transform_indices = @transform_4, window_bounds = array<i64: 1, 32>}, {transform_indices = @transform_5, window_bounds = array<i64: 2, 8, 32>}]} {
    %c0 = arith.constant 0 : index
    %c0_0 = arith.constant 0 : index
    %c0_1 = arith.constant 0 : index
    %0 = vector.load %arg1[%c0, %c0_0, %c0_1] : memref<2x8x32xbf16, #tpu.memory_space<vmem>>, vector<2x8x32xbf16>
    %1 = vector.shape_cast %0 : vector<2x8x32xbf16> to vector<16x32xbf16>
    %c0_2 = arith.constant 0 : index
    %c0_3 = arith.constant 0 : index
    %2 = vector.load %arg2[%c0_2, %c0_3] : memref<32x96xbf16, #tpu.memory_space<vmem>>, vector<32x96xbf16>
    %cst = arith.constant dense<0.000000e+00> : vector<16x96xf32>
    %3 = tpu.matmul %1, %2, %cst {dimension_numbers = #tpu.dot_dimension_numbers<[1], [0], [0], [1], [0, 0, 1, 1], [], []>} : vector<16x32xbf16>, vector<32x96xbf16>, vector<16x96xf32> -> vector<16x96xf32>
    %c0_4 = arith.constant 0 : index
    %c0_5 = arith.constant 0 : index
    %4 = vector.load %arg3[%c0_4, %c0_5] : memref<1x96xf32, #tpu.memory_space<vmem>>, vector<1x96xf32>
    %5 = vector.broadcast %4 : vector<1x96xf32> to vector<16x96xf32>
    %6 = arith.addf %3, %5 : vector<16x96xf32>
    %7 = vector.shape_cast %6 : vector<16x96xf32> to vector<2x8x96xf32>
    %8 = arith.truncf %7 : vector<2x8x96xf32> to vector<2x8x96xbf16>
    %c0_6 = arith.constant 0 : index
    %c0_7 = arith.constant 0 : index
    %c0_8 = arith.constant 0 : index
    %9 = vector.load %arg7[%c0_6, %c0_7, %c0_8] : memref<2x8x96xbf16, #tpu.memory_space<vmem>>, vector<2x8x96xbf16>
    tpu.vector_store %arg7[%c0_6, %c0_7, %c0_8], %8 {strides = array<i32>} : memref<2x8x96xbf16, #tpu.memory_space<vmem>>, vector<2x8x96xbf16>,
    %10 = tpu.iota {dimensions = array<i32: 0>} : vector<8x8xi32>
    %11 = tpu.iota {dimensions = array<i32: 1>} : vector<8x8xi32>
    %12 = arith.cmpi sge, %10, %11 : vector<8x8xi32>
    %cst_9 = arith.constant 0.000000e+00 : f32
    %cst_10 = arith.constant -1.000000e+30 : f32
    %13 = vector.broadcast %cst_9 : f32 to vector<8x8xf32>
    %14 = vector.broadcast %cst_10 : f32 to vector<8x8xf32>
    %15 = arith.select %12, %13, %14 : vector<8x8xi1>, vector<8x8xf32>
    %c0_11 = arith.constant 0 : index
    %c0_12 = arith.constant 0 : index
    %c0_13 = arith.constant 0 : index
    %16 = vector.load %arg7[%c0_11, %c0_12, %c0_13] : memref<2x8x96xbf16, #tpu.memory_space<vmem>>, vector<2x8x4xbf16>
    %c0_14 = arith.constant 0 : index
    %c0_15 = arith.constant 0 : index
    %c32 = arith.constant 32 : index
    %17 = vector.load %arg7[%c0_14, %c0_15, %c32] : memref<2x8x96xbf16, #tpu.memory_space<vmem>>, vector<2x8x4xbf16>
    %c0_16 = arith.constant 0 : index
    %c0_17 = arith.constant 0 : index
    %c64 = arith.constant 64 : index
    %18 = vector.load %arg7[%c0_16, %c0_17, %c64] : memref<2x8x96xbf16, #tpu.memory_space<vmem>>, vector<2x8x4xbf16>
    "tpu.trace_start"() <{level = 10 : i32, message = "btd,bsd->bts"}> : () -> ()
    %cst_18 = arith.constant dense<0.000000e+00> : vector<2x8x8xf32>
    %19 = tpu.matmul %16, %17, %cst_18 {dimension_numbers = #tpu.dot_dimension_numbers<[2], [2], [1], [1], [0, 0, 0, 1, 1, 1], [0], [0]>} : vector<2x8x4xbf16>, vector<2x8x4xbf16>, vector<2x8x8xf32> -> vector<2x8x8xf32>
    "tpu.trace_stop"() : () -> ()
    %20 = vector.shape_cast %15 : vector<8x8xf32> to vector<1x8x8xf32>
    %21 = vector.broadcast %20 : vector<1x8x8xf32> to vector<2x8x8xf32>
    %22 = arith.addf %19, %21 : vector<2x8x8xf32>
    %cst_19 = arith.constant dense<0xFF800000> : vector<2x8xf32>
    %23 = vector.multi_reduction <maximumf>, %22, %cst_19 [2] : vector<2x8x8xf32> to vector<2x8xf32>
    %24 = vector.shape_cast %23 : vector<2x8xf32> to vector<2x8x1xf32>
    %25 = vector.broadcast %24 : vector<2x8x1xf32> to vector<2x8x8xf32>
    %26 = arith.subf %22, %25 : vector<2x8x8xf32>
    %27 = math.exp %26 : vector<2x8x8xf32>
    %cst_20 = arith.constant dense<0.000000e+00> : vector<2x8xf32>
    %28 = vector.multi_reduction <add>, %27, %cst_20 [2] : vector<2x8x8xf32> to vector<2x8xf32>
    %29 = vector.shape_cast %28 : vector<2x8xf32> to vector<2x8x1xf32>
    %30 = tpu.reciprocal %29 {approx = true} : vector<2x8x1xf32> -> vector<2x8x1xf32>
    %31 = vector.broadcast %30 : vector<2x8x1xf32> to vector<2x8x8xf32>
    %32 = arith.mulf %27, %31 : vector<2x8x8xf32>
    %33 = arith.truncf %32 : vector<2x8x8xf32> to vector<2x8x8xbf16>
    "tpu.trace_start"() <{level = 10 : i32, message = "bts,bsd->btd"}> : () -> ()
    %cst_21 = arith.constant dense<0.000000e+00> : vector<2x8x4xf32>
    %34 = tpu.matmul %33, %18, %cst_21 {dimension_numbers = #tpu.dot_dimension_numbers<[2], [1], [1], [2], [0, 0, 0, 1, 1, 2], [0], [0]>} : vector<2x8x8xbf16>, vector<2x8x4xbf16>, vector<2x8x4xf32> -> vector<2x8x4xf32>
    "tpu.trace_stop"() : () -> ()
    %35 = arith.truncf %34 : vector<2x8x4xf32> to vector<2x8x4xbf16>
    %c0_22 = arith.constant 0 : index
    %c0_23 = arith.constant 0 : index
    %c0_24 = arith.constant 0 : index
    %36 = vector.load %arg8[%c0_22, %c0_23, %c0_24] : memref<2x8x32xbf16, #tpu.memory_space<vmem>>, vector<2x8x4xbf16>
    tpu.vector_store %arg8[%c0_22, %c0_23, %c0_24], %35 {strides = array<i32>} : memref<2x8x32xbf16, #tpu.memory_space<vmem>>, vector<2x8x4xbf16>,
    %c0_25 = arith.constant 0 : index
    %c0_26 = arith.constant 0 : index
    %c4 = arith.constant 4 : index
    %37 = vector.load %arg7[%c0_25, %c0_26, %c4] : memref<2x8x96xbf16, #tpu.memory_space<vmem>>, vector<2x8x4xbf16>
    %c0_27 = arith.constant 0 : index
    %c0_28 = arith.constant 0 : index
    %c36 = arith.constant 36 : index
    %38 = vector.load %arg7[%c0_27, %c0_28, %c36] : memref<2x8x96xbf16, #tpu.memory_space<vmem>>, vector<2x8x4xbf16>
    %c0_29 = arith.constant 0 : index
    %c0_30 = arith.constant 0 : index
    %c68 = arith.constant 68 : index
    %39 = vector.load %arg7[%c0_29, %c0_30, %c68] : memref<2x8x96xbf16, #tpu.memory_space<vmem>>, vector<2x8x4xbf16>
    "tpu.trace_start"() <{level = 10 : i32, message = "btd,bsd->bts"}> : () -> ()
    %cst_31 = arith.constant dense<0.000000e+00> : vector<2x8x8xf32>
    %40 = tpu.matmul %37, %38, %cst_31 {dimension_numbers = #tpu.dot_dimension_numbers<[2], [2], [1], [1], [0, 0, 0, 1, 1, 1], [0], [0]>} : vector<2x8x4xbf16>, vector<2x8x4xbf16>, vector<2x8x8xf32> -> vector<2x8x8xf32>
    "tpu.trace_stop"() : () -> ()
    %41 = vector.shape_cast %15 : vector<8x8xf32> to vector<1x8x8xf32>
    %42 = vector.broadcast %41 : vector<1x8x8xf32> to vector<2x8x8xf32>
    %43 = arith.addf %40, %42 : vector<2x8x8xf32>
    %cst_32 = arith.constant dense<0xFF800000> : vector<2x8xf32>
    %44 = vector.multi_reduction <maximumf>, %43, %cst_32 [2] : vector<2x8x8xf32> to vector<2x8xf32>
    %45 = vector.shape_cast %44 : vector<2x8xf32> to vector<2x8x1xf32>
    %46 = vector.broadcast %45 : vector<2x8x1xf32> to vector<2x8x8xf32>
    %47 = arith.subf %43, %46 : vector<2x8x8xf32>
    %48 = math.exp %47 : vector<2x8x8xf32>
    %cst_33 = arith.constant dense<0.000000e+00> : vector<2x8xf32>
    %49 = vector.multi_reduction <add>, %48, %cst_33 [2] : vector<2x8x8xf32> to vector<2x8xf32>
    %50 = vector.shape_cast %49 : vector<2x8xf32> to vector<2x8x1xf32>
    %51 = tpu.reciprocal %50 {approx = true} : vector<2x8x1xf32> -> vector<2x8x1xf32>
    %52 = vector.broadcast %51 : vector<2x8x1xf32> to vector<2x8x8xf32>
    %53 = arith.mulf %48, %52 : vector<2x8x8xf32>
    %54 = arith.truncf %53 : vector<2x8x8xf32> to vector<2x8x8xbf16>
    "tpu.trace_start"() <{level = 10 : i32, message = "bts,bsd->btd"}> : () -> ()
    %cst_34 = arith.constant dense<0.000000e+00> : vector<2x8x4xf32>
    %55 = tpu.matmul %54, %39, %cst_34 {dimension_numbers = #tpu.dot_dimension_numbers<[2], [1], [1], [2], [0, 0, 0, 1, 1, 2], [0], [0]>} : vector<2x8x8xbf16>, vector<2x8x4xbf16>, vector<2x8x4xf32> -> vector<2x8x4xf32>
    "tpu.trace_stop"() : () -> ()
    %56 = arith.truncf %55 : vector<2x8x4xf32> to vector<2x8x4xbf16>
    %c0_35 = arith.constant 0 : index
    %c0_36 = arith.constant 0 : index
    %c4_37 = arith.constant 4 : index
    %57 = vector.load %arg8[%c0_35, %c0_36, %c4_37] : memref<2x8x32xbf16, #tpu.memory_space<vmem>>, vector<2x8x4xbf16>
    tpu.vector_store %arg8[%c0_35, %c0_36, %c4_37], %56 {strides = array<i32>} : memref<2x8x32xbf16, #tpu.memory_space<vmem>>, vector<2x8x4xbf16>,
    %c0_38 = arith.constant 0 : index
    %c0_39 = arith.constant 0 : index
    %c8 = arith.constant 8 : index
    %58 = vector.load %arg7[%c0_38, %c0_39, %c8] : memref<2x8x96xbf16, #tpu.memory_space<vmem>>, vector<2x8x4xbf16>
    %c0_40 = arith.constant 0 : index
    %c0_41 = arith.constant 0 : index
    %c40 = arith.constant 40 : index
    %59 = vector.load %arg7[%c0_40, %c0_41, %c40] : memref<2x8x96xbf16, #tpu.memory_space<vmem>>, vector<2x8x4xbf16>
    %c0_42 = arith.constant 0 : index
    %c0_43 = arith.constant 0 : index
    %c72 = arith.constant 72 : index
    %60 = vector.load %arg7[%c0_42, %c0_43, %c72] : memref<2x8x96xbf16, #tpu.memory_space<vmem>>, vector<2x8x4xbf16>
    "tpu.trace_start"() <{level = 10 : i32, message = "btd,bsd->bts"}> : () -> ()
    %cst_44 = arith.constant dense<0.000000e+00> : vector<2x8x8xf32>
    %61 = tpu.matmul %58, %59, %cst_44 {dimension_numbers = #tpu.dot_dimension_numbers<[2], [2], [1], [1], [0, 0, 0, 1, 1, 1], [0], [0]>} : vector<2x8x4xbf16>, vector<2x8x4xbf16>, vector<2x8x8xf32> -> vector<2x8x8xf32>
    "tpu.trace_stop"() : () -> ()
    %62 = vector.shape_cast %15 : vector<8x8xf32> to vector<1x8x8xf32>
    %63 = vector.broadcast %62 : vector<1x8x8xf32> to vector<2x8x8xf32>
    %64 = arith.addf %61, %63 : vector<2x8x8xf32>
    %cst_45 = arith.constant dense<0xFF800000> : vector<2x8xf32>
    %65 = vector.multi_reduction <maximumf>, %64, %cst_45 [2] : vector<2x8x8xf32> to vector<2x8xf32>
    %66 = vector.shape_cast %65 : vector<2x8xf32> to vector<2x8x1xf32>
    %67 = vector.broadcast %66 : vector<2x8x1xf32> to vector<2x8x8xf32>
    %68 = arith.subf %64, %67 : vector<2x8x8xf32>
    %69 = math.exp %68 : vector<2x8x8xf32>
    %cst_46 = arith.constant dense<0.000000e+00> : vector<2x8xf32>
    %70 = vector.multi_reduction <add>, %69, %cst_46 [2] : vector<2x8x8xf32> to vector<2x8xf32>
    %71 = vector.shape_cast %70 : vector<2x8xf32> to vector<2x8x1xf32>
    %72 = tpu.reciprocal %71 {approx = true} : vector<2x8x1xf32> -> vector<2x8x1xf32>
    %73 = vector.broadcast %72 : vector<2x8x1xf32> to vector<2x8x8xf32>
    %74 = arith.mulf %69, %73 : vector<2x8x8xf32>
    %75 = arith.truncf %74 : vector<2x8x8xf32> to vector<2x8x8xbf16>
    "tpu.trace_start"() <{level = 10 : i32, message = "bts,bsd->btd"}> : () -> ()
    %cst_47 = arith.constant dense<0.000000e+00> : vector<2x8x4xf32>
    %76 = tpu.matmul %75, %60, %cst_47 {dimension_numbers = #tpu.dot_dimension_numbers<[2], [1], [1], [2], [0, 0, 0, 1, 1, 2], [0], [0]>} : vector<2x8x8xbf16>, vector<2x8x4xbf16>, vector<2x8x4xf32> -> vector<2x8x4xf32>
    "tpu.trace_stop"() : () -> ()
    %77 = arith.truncf %76 : vector<2x8x4xf32> to vector<2x8x4xbf16>
    %c0_48 = arith.constant 0 : index
    %c0_49 = arith.constant 0 : index
    %c8_50 = arith.constant 8 : index
    %78 = vector.load %arg8[%c0_48, %c0_49, %c8_50] : memref<2x8x32xbf16, #tpu.memory_space<vmem>>, vector<2x8x4xbf16>
    tpu.vector_store %arg8[%c0_48, %c0_49, %c8_50], %77 {strides = array<i32>} : memref<2x8x32xbf16, #tpu.memory_space<vmem>>, vector<2x8x4xbf16>,
    %c0_51 = arith.constant 0 : index
    %c0_52 = arith.constant 0 : index
    %c12 = arith.constant 12 : index
    %79 = vector.load %arg7[%c0_51, %c0_52, %c12] : memref<2x8x96xbf16, #tpu.memory_space<vmem>>, vector<2x8x4xbf16>
    %c0_53 = arith.constant 0 : index
    %c0_54 = arith.constant 0 : index
    %c44 = arith.constant 44 : index
    %80 = vector.load %arg7[%c0_53, %c0_54, %c44] : memref<2x8x96xbf16, #tpu.memory_space<vmem>>, vector<2x8x4xbf16>
    %c0_55 = arith.constant 0 : index
    %c0_56 = arith.constant 0 : index
    %c76 = arith.constant 76 : index
    %81 = vector.load %arg7[%c0_55, %c0_56, %c76] : memref<2x8x96xbf16, #tpu.memory_space<vmem>>, vector<2x8x4xbf16>
    "tpu.trace_start"() <{level = 10 : i32, message = "btd,bsd->bts"}> : () -> ()
    %cst_57 = arith.constant dense<0.000000e+00> : vector<2x8x8xf32>
    %82 = tpu.matmul %79, %80, %cst_57 {dimension_numbers = #tpu.dot_dimension_numbers<[2], [2], [1], [1], [0, 0, 0, 1, 1, 1], [0], [0]>} : vector<2x8x4xbf16>, vector<2x8x4xbf16>, vector<2x8x8xf32> -> vector<2x8x8xf32>
    "tpu.trace_stop"() : () -> ()
    %83 = vector.shape_cast %15 : vector<8x8xf32> to vector<1x8x8xf32>
    %84 = vector.broadcast %83 : vector<1x8x8xf32> to vector<2x8x8xf32>
    %85 = arith.addf %82, %84 : vector<2x8x8xf32>
    %cst_58 = arith.constant dense<0xFF800000> : vector<2x8xf32>
    %86 = vector.multi_reduction <maximumf>, %85, %cst_58 [2] : vector<2x8x8xf32> to vector<2x8xf32>
    %87 = vector.shape_cast %86 : vector<2x8xf32> to vector<2x8x1xf32>
    %88 = vector.broadcast %87 : vector<2x8x1xf32> to vector<2x8x8xf32>
    %89 = arith.subf %85, %88 : vector<2x8x8xf32>
    %90 = math.exp %89 : vector<2x8x8xf32>
    %cst_59 = arith.constant dense<0.000000e+00> : vector<2x8xf32>
    %91 = vector.multi_reduction <add>, %90, %cst_59 [2] : vector<2x8x8xf32> to vector<2x8xf32>
    %92 = vector.shape_cast %91 : vector<2x8xf32> to vector<2x8x1xf32>
    %93 = tpu.reciprocal %92 {approx = true} : vector<2x8x1xf32> -> vector<2x8x1xf32>
    %94 = vector.broadcast %93 : vector<2x8x1xf32> to vector<2x8x8xf32>
    %95 = arith.mulf %90, %94 : vector<2x8x8xf32>
    %96 = arith.truncf %95 : vector<2x8x8xf32> to vector<2x8x8xbf16>
    "tpu.trace_start"() <{level = 10 : i32, message = "bts,bsd->btd"}> : () -> ()
    %cst_60 = arith.constant dense<0.000000e+00> : vector<2x8x4xf32>
    %97 = tpu.matmul %96, %81, %cst_60 {dimension_numbers = #tpu.dot_dimension_numbers<[2], [1], [1], [2], [0, 0, 0, 1, 1, 2], [0], [0]>} : vector<2x8x8xbf16>, vector<2x8x4xbf16>, vector<2x8x4xf32> -> vector<2x8x4xf32>
    "tpu.trace_stop"() : () -> ()
    %98 = arith.truncf %97 : vector<2x8x4xf32> to vector<2x8x4xbf16>
    %c0_61 = arith.constant 0 : index
    %c0_62 = arith.constant 0 : index
    %c12_63 = arith.constant 12 : index
    %99 = vector.load %arg8[%c0_61, %c0_62, %c12_63] : memref<2x8x32xbf16, #tpu.memory_space<vmem>>, vector<2x8x4xbf16>
    tpu.vector_store %arg8[%c0_61, %c0_62, %c12_63], %98 {strides = array<i32>} : memref<2x8x32xbf16, #tpu.memory_space<vmem>>, vector<2x8x4xbf16>,
    %c0_64 = arith.constant 0 : index
    %c0_65 = arith.constant 0 : index
    %c16 = arith.constant 16 : index
    %100 = vector.load %arg7[%c0_64, %c0_65, %c16] : memref<2x8x96xbf16, #tpu.memory_space<vmem>>, vector<2x8x4xbf16>
    %c0_66 = arith.constant 0 : index
    %c0_67 = arith.constant 0 : index
    %c48 = arith.constant 48 : index
    %101 = vector.load %arg7[%c0_66, %c0_67, %c48] : memref<2x8x96xbf16, #tpu.memory_space<vmem>>, vector<2x8x4xbf16>
    %c0_68 = arith.constant 0 : index
    %c0_69 = arith.constant 0 : index
    %c80 = arith.constant 80 : index
    %102 = vector.load %arg7[%c0_68, %c0_69, %c80] : memref<2x8x96xbf16, #tpu.memory_space<vmem>>, vector<2x8x4xbf16>
    "tpu.trace_start"() <{level = 10 : i32, message = "btd,bsd->bts"}> : () -> ()
    %cst_70 = arith.constant dense<0.000000e+00> : vector<2x8x8xf32>
    %103 = tpu.matmul %100, %101, %cst_70 {dimension_numbers = #tpu.dot_dimension_numbers<[2], [2], [1], [1], [0, 0, 0, 1, 1, 1], [0], [0]>} : vector<2x8x4xbf16>, vector<2x8x4xbf16>, vector<2x8x8xf32> -> vector<2x8x8xf32>
    "tpu.trace_stop"() : () -> ()
    %104 = vector.shape_cast %15 : vector<8x8xf32> to vector<1x8x8xf32>
    %105 = vector.broadcast %104 : vector<1x8x8xf32> to vector<2x8x8xf32>
    %106 = arith.addf %103, %105 : vector<2x8x8xf32>
    %cst_71 = arith.constant dense<0xFF800000> : vector<2x8xf32>
    %107 = vector.multi_reduction <maximumf>, %106, %cst_71 [2] : vector<2x8x8xf32> to vector<2x8xf32>
    %108 = vector.shape_cast %107 : vector<2x8xf32> to vector<2x8x1xf32>
    %109 = vector.broadcast %108 : vector<2x8x1xf32> to vector<2x8x8xf32>
    %110 = arith.subf %106, %109 : vector<2x8x8xf32>
    %111 = math.exp %110 : vector<2x8x8xf32>
    %cst_72 = arith.constant dense<0.000000e+00> : vector<2x8xf32>
    %112 = vector.multi_reduction <add>, %111, %cst_72 [2] : vector<2x8x8xf32> to vector<2x8xf32>
    %113 = vector.shape_cast %112 : vector<2x8xf32> to vector<2x8x1xf32>
    %114 = tpu.reciprocal %113 {approx = true} : vector<2x8x1xf32> -> vector<2x8x1xf32>
    %115 = vector.broadcast %114 : vector<2x8x1xf32> to vector<2x8x8xf32>
    %116 = arith.mulf %111, %115 : vector<2x8x8xf32>
    %117 = arith.truncf %116 : vector<2x8x8xf32> to vector<2x8x8xbf16>
    "tpu.trace_start"() <{level = 10 : i32, message = "bts,bsd->btd"}> : () -> ()
    %cst_73 = arith.constant dense<0.000000e+00> : vector<2x8x4xf32>
    %118 = tpu.matmul %117, %102, %cst_73 {dimension_numbers = #tpu.dot_dimension_numbers<[2], [1], [1], [2], [0, 0, 0, 1, 1, 2], [0], [0]>} : vector<2x8x8xbf16>, vector<2x8x4xbf16>, vector<2x8x4xf32> -> vector<2x8x4xf32>
    "tpu.trace_stop"() : () -> ()
    %119 = arith.truncf %118 : vector<2x8x4xf32> to vector<2x8x4xbf16>
    %c0_74 = arith.constant 0 : index
    %c0_75 = arith.constant 0 : index
    %c16_76 = arith.constant 16 : index
    %120 = vector.load %arg8[%c0_74, %c0_75, %c16_76] : memref<2x8x32xbf16, #tpu.memory_space<vmem>>, vector<2x8x4xbf16>
    tpu.vector_store %arg8[%c0_74, %c0_75, %c16_76], %119 {strides = array<i32>} : memref<2x8x32xbf16, #tpu.memory_space<vmem>>, vector<2x8x4xbf16>,
    %c0_77 = arith.constant 0 : index
    %c0_78 = arith.constant 0 : index
    %c20 = arith.constant 20 : index
    %121 = vector.load %arg7[%c0_77, %c0_78, %c20] : memref<2x8x96xbf16, #tpu.memory_space<vmem>>, vector<2x8x4xbf16>
    %c0_79 = arith.constant 0 : index
    %c0_80 = arith.constant 0 : index
    %c52 = arith.constant 52 : index
    %122 = vector.load %arg7[%c0_79, %c0_80, %c52] : memref<2x8x96xbf16, #tpu.memory_space<vmem>>, vector<2x8x4xbf16>
    %c0_81 = arith.constant 0 : index
    %c0_82 = arith.constant 0 : index
    %c84 = arith.constant 84 : index
    %123 = vector.load %arg7[%c0_81, %c0_82, %c84] : memref<2x8x96xbf16, #tpu.memory_space<vmem>>, vector<2x8x4xbf16>
    "tpu.trace_start"() <{level = 10 : i32, message = "btd,bsd->bts"}> : () -> ()
    %cst_83 = arith.constant dense<0.000000e+00> : vector<2x8x8xf32>
    %124 = tpu.matmul %121, %122, %cst_83 {dimension_numbers = #tpu.dot_dimension_numbers<[2], [2], [1], [1], [0, 0, 0, 1, 1, 1], [0], [0]>} : vector<2x8x4xbf16>, vector<2x8x4xbf16>, vector<2x8x8xf32> -> vector<2x8x8xf32>
    "tpu.trace_stop"() : () -> ()
    %125 = vector.shape_cast %15 : vector<8x8xf32> to vector<1x8x8xf32>
    %126 = vector.broadcast %125 : vector<1x8x8xf32> to vector<2x8x8xf32>
    %127 = arith.addf %124, %126 : vector<2x8x8xf32>
    %cst_84 = arith.constant dense<0xFF800000> : vector<2x8xf32>
    %128 = vector.multi_reduction <maximumf>, %127, %cst_84 [2] : vector<2x8x8xf32> to vector<2x8xf32>
    %129 = vector.shape_cast %128 : vector<2x8xf32> to vector<2x8x1xf32>
    %130 = vector.broadcast %129 : vector<2x8x1xf32> to vector<2x8x8xf32>
    %131 = arith.subf %127, %130 : vector<2x8x8xf32>
    %132 = math.exp %131 : vector<2x8x8xf32>
    %cst_85 = arith.constant dense<0.000000e+00> : vector<2x8xf32>
    %133 = vector.multi_reduction <add>, %132, %cst_85 [2] : vector<2x8x8xf32> to vector<2x8xf32>
    %134 = vector.shape_cast %133 : vector<2x8xf32> to vector<2x8x1xf32>
    %135 = tpu.reciprocal %134 {approx = true} : vector<2x8x1xf32> -> vector<2x8x1xf32>
    %136 = vector.broadcast %135 : vector<2x8x1xf32> to vector<2x8x8xf32>
    %137 = arith.mulf %132, %136 : vector<2x8x8xf32>
    %138 = arith.truncf %137 : vector<2x8x8xf32> to vector<2x8x8xbf16>
    "tpu.trace_start"() <{level = 10 : i32, message = "bts,bsd->btd"}> : () -> ()
    %cst_86 = arith.constant dense<0.000000e+00> : vector<2x8x4xf32>
    %139 = tpu.matmul %138, %123, %cst_86 {dimension_numbers = #tpu.dot_dimension_numbers<[2], [1], [1], [2], [0, 0, 0, 1, 1, 2], [0], [0]>} : vector<2x8x8xbf16>, vector<2x8x4xbf16>, vector<2x8x4xf32> -> vector<2x8x4xf32>
    "tpu.trace_stop"() : () -> ()
    %140 = arith.truncf %139 : vector<2x8x4xf32> to vector<2x8x4xbf16>
    %c0_87 = arith.constant 0 : index
    %c0_88 = arith.constant 0 : index
    %c20_89 = arith.constant 20 : index
    %141 = vector.load %arg8[%c0_87, %c0_88, %c20_89] : memref<2x8x32xbf16, #tpu.memory_space<vmem>>, vector<2x8x4xbf16>
    tpu.vector_store %arg8[%c0_87, %c0_88, %c20_89], %140 {strides = array<i32>} : memref<2x8x32xbf16, #tpu.memory_space<vmem>>, vector<2x8x4xbf16>,
    %c0_90 = arith.constant 0 : index
    %c0_91 = arith.constant 0 : index
    %c24 = arith.constant 24 : index
    %142 = vector.load %arg7[%c0_90, %c0_91, %c24] : memref<2x8x96xbf16, #tpu.memory_space<vmem>>, vector<2x8x4xbf16>
    %c0_92 = arith.constant 0 : index
    %c0_93 = arith.constant 0 : index
    %c56 = arith.constant 56 : index
    %143 = vector.load %arg7[%c0_92, %c0_93, %c56] : memref<2x8x96xbf16, #tpu.memory_space<vmem>>, vector<2x8x4xbf16>
    %c0_94 = arith.constant 0 : index
    %c0_95 = arith.constant 0 : index
    %c88 = arith.constant 88 : index
    %144 = vector.load %arg7[%c0_94, %c0_95, %c88] : memref<2x8x96xbf16, #tpu.memory_space<vmem>>, vector<2x8x4xbf16>
    "tpu.trace_start"() <{level = 10 : i32, message = "btd,bsd->bts"}> : () -> ()
    %cst_96 = arith.constant dense<0.000000e+00> : vector<2x8x8xf32>
    %145 = tpu.matmul %142, %143, %cst_96 {dimension_numbers = #tpu.dot_dimension_numbers<[2], [2], [1], [1], [0, 0, 0, 1, 1, 1], [0], [0]>} : vector<2x8x4xbf16>, vector<2x8x4xbf16>, vector<2x8x8xf32> -> vector<2x8x8xf32>
    "tpu.trace_stop"() : () -> ()
    %146 = vector.shape_cast %15 : vector<8x8xf32> to vector<1x8x8xf32>
    %147 = vector.broadcast %146 : vector<1x8x8xf32> to vector<2x8x8xf32>
    %148 = arith.addf %145, %147 : vector<2x8x8xf32>
    %cst_97 = arith.constant dense<0xFF800000> : vector<2x8xf32>
    %149 = vector.multi_reduction <maximumf>, %148, %cst_97 [2] : vector<2x8x8xf32> to vector<2x8xf32>
    %150 = vector.shape_cast %149 : vector<2x8xf32> to vector<2x8x1xf32>
    %151 = vector.broadcast %150 : vector<2x8x1xf32> to vector<2x8x8xf32>
    %152 = arith.subf %148, %151 : vector<2x8x8xf32>
    %153 = math.exp %152 : vector<2x8x8xf32>
    %cst_98 = arith.constant dense<0.000000e+00> : vector<2x8xf32>
    %154 = vector.multi_reduction <add>, %153, %cst_98 [2] : vector<2x8x8xf32> to vector<2x8xf32>
    %155 = vector.shape_cast %154 : vector<2x8xf32> to vector<2x8x1xf32>
    %156 = tpu.reciprocal %155 {approx = true} : vector<2x8x1xf32> -> vector<2x8x1xf32>
    %157 = vector.broadcast %156 : vector<2x8x1xf32> to vector<2x8x8xf32>
    %158 = arith.mulf %153, %157 : vector<2x8x8xf32>
    %159 = arith.truncf %158 : vector<2x8x8xf32> to vector<2x8x8xbf16>
    "tpu.trace_start"() <{level = 10 : i32, message = "bts,bsd->btd"}> : () -> ()
    %cst_99 = arith.constant dense<0.000000e+00> : vector<2x8x4xf32>
    %160 = tpu.matmul %159, %144, %cst_99 {dimension_numbers = #tpu.dot_dimension_numbers<[2], [1], [1], [2], [0, 0, 0, 1, 1, 2], [0], [0]>} : vector<2x8x8xbf16>, vector<2x8x4xbf16>, vector<2x8x4xf32> -> vector<2x8x4xf32>
    "tpu.trace_stop"() : () -> ()
    %161 = arith.truncf %160 : vector<2x8x4xf32> to vector<2x8x4xbf16>
    %c0_100 = arith.constant 0 : index
    %c0_101 = arith.constant 0 : index
    %c24_102 = arith.constant 24 : index
    %162 = vector.load %arg8[%c0_100, %c0_101, %c24_102] : memref<2x8x32xbf16, #tpu.memory_space<vmem>>, vector<2x8x4xbf16>
    tpu.vector_store %arg8[%c0_100, %c0_101, %c24_102], %161 {strides = array<i32>} : memref<2x8x32xbf16, #tpu.memory_space<vmem>>, vector<2x8x4xbf16>,
    %c0_103 = arith.constant 0 : index
    %c0_104 = arith.constant 0 : index
    %c28 = arith.constant 28 : index
    %163 = vector.load %arg7[%c0_103, %c0_104, %c28] : memref<2x8x96xbf16, #tpu.memory_space<vmem>>, vector<2x8x4xbf16>
    %c0_105 = arith.constant 0 : index
    %c0_106 = arith.constant 0 : index
    %c60 = arith.constant 60 : index
    %164 = vector.load %arg7[%c0_105, %c0_106, %c60] : memref<2x8x96xbf16, #tpu.memory_space<vmem>>, vector<2x8x4xbf16>
    %c0_107 = arith.constant 0 : index
    %c0_108 = arith.constant 0 : index
    %c92 = arith.constant 92 : index
    %165 = vector.load %arg7[%c0_107, %c0_108, %c92] : memref<2x8x96xbf16, #tpu.memory_space<vmem>>, vector<2x8x4xbf16>
    "tpu.trace_start"() <{level = 10 : i32, message = "btd,bsd->bts"}> : () -> ()
    %cst_109 = arith.constant dense<0.000000e+00> : vector<2x8x8xf32>
    %166 = tpu.matmul %163, %164, %cst_109 {dimension_numbers = #tpu.dot_dimension_numbers<[2], [2], [1], [1], [0, 0, 0, 1, 1, 1], [0], [0]>} : vector<2x8x4xbf16>, vector<2x8x4xbf16>, vector<2x8x8xf32> -> vector<2x8x8xf32>
    "tpu.trace_stop"() : () -> ()
    %167 = vector.shape_cast %15 : vector<8x8xf32> to vector<1x8x8xf32>
    %168 = vector.broadcast %167 : vector<1x8x8xf32> to vector<2x8x8xf32>
    %169 = arith.addf %166, %168 : vector<2x8x8xf32>
    %cst_110 = arith.constant dense<0xFF800000> : vector<2x8xf32>
    %170 = vector.multi_reduction <maximumf>, %169, %cst_110 [2] : vector<2x8x8xf32> to vector<2x8xf32>
    %171 = vector.shape_cast %170 : vector<2x8xf32> to vector<2x8x1xf32>
    %172 = vector.broadcast %171 : vector<2x8x1xf32> to vector<2x8x8xf32>
    %173 = arith.subf %169, %172 : vector<2x8x8xf32>
    %174 = math.exp %173 : vector<2x8x8xf32>
    %cst_111 = arith.constant dense<0.000000e+00> : vector<2x8xf32>
    %175 = vector.multi_reduction <add>, %174, %cst_111 [2] : vector<2x8x8xf32> to vector<2x8xf32>
    %176 = vector.shape_cast %175 : vector<2x8xf32> to vector<2x8x1xf32>
    %177 = tpu.reciprocal %176 {approx = true} : vector<2x8x1xf32> -> vector<2x8x1xf32>
    %178 = vector.broadcast %177 : vector<2x8x1xf32> to vector<2x8x8xf32>
    %179 = arith.mulf %174, %178 : vector<2x8x8xf32>
    %180 = arith.truncf %179 : vector<2x8x8xf32> to vector<2x8x8xbf16>
    "tpu.trace_start"() <{level = 10 : i32, message = "bts,bsd->btd"}> : () -> ()
    %cst_112 = arith.constant dense<0.000000e+00> : vector<2x8x4xf32>
    %181 = tpu.matmul %180, %165, %cst_112 {dimension_numbers = #tpu.dot_dimension_numbers<[2], [1], [1], [2], [0, 0, 0, 1, 1, 2], [0], [0]>} : vector<2x8x8xbf16>, vector<2x8x4xbf16>, vector<2x8x4xf32> -> vector<2x8x4xf32>
    "tpu.trace_stop"() : () -> ()
    %182 = arith.truncf %181 : vector<2x8x4xf32> to vector<2x8x4xbf16>
    %c0_113 = arith.constant 0 : index
    %c0_114 = arith.constant 0 : index
    %c28_115 = arith.constant 28 : index
    %183 = vector.load %arg8[%c0_113, %c0_114, %c28_115] : memref<2x8x32xbf16, #tpu.memory_space<vmem>>, vector<2x8x4xbf16>
    tpu.vector_store %arg8[%c0_113, %c0_114, %c28_115], %182 {strides = array<i32>} : memref<2x8x32xbf16, #tpu.memory_space<vmem>>, vector<2x8x4xbf16>,
    %c0_116 = arith.constant 0 : index
    %c0_117 = arith.constant 0 : index
    %c0_118 = arith.constant 0 : index
    %184 = vector.load %arg8[%c0_116, %c0_117, %c0_118] : memref<2x8x32xbf16, #tpu.memory_space<vmem>>, vector<2x8x32xbf16>
    %185 = vector.shape_cast %184 : vector<2x8x32xbf16> to vector<16x32xbf16>
    %c0_119 = arith.constant 0 : index
    %c0_120 = arith.constant 0 : index
    %186 = vector.load %arg4[%c0_119, %c0_120] : memref<32x32xbf16, #tpu.memory_space<vmem>>, vector<32x32xbf16>
    %cst_121 = arith.constant dense<0.000000e+00> : vector<16x32xf32>
    %187 = tpu.matmul %185, %186, %cst_121 {dimension_numbers = #tpu.dot_dimension_numbers<[1], [0], [0], [1], [0, 0, 1, 1], [], []>} : vector<16x32xbf16>, vector<32x32xbf16>, vector<16x32xf32> -> vector<16x32xf32>
    %c0_122 = arith.constant 0 : index
    %c0_123 = arith.constant 0 : index
    %188 = vector.load %arg5[%c0_122, %c0_123] : memref<1x32xf32, #tpu.memory_space<vmem>>, vector<1x32xf32>
    %189 = vector.broadcast %188 : vector<1x32xf32> to vector<16x32xf32>
    %190 = arith.addf %187, %189 : vector<16x32xf32>
    %191 = vector.shape_cast %190 : vector<16x32xf32> to vector<2x8x32xf32>
    %c0_124 = arith.constant 0 : index
    %c0_125 = arith.constant 0 : index
    %c0_126 = arith.constant 0 : index
    %192 = vector.load %arg6[%c0_124, %c0_125, %c0_126] : memref<2x8x32xf32, #tpu.memory_space<vmem>>, vector<2x8x32xf32>
    tpu.vector_store %arg6[%c0_124, %c0_125, %c0_126], %191 {strides = array<i32>} : memref<2x8x32xf32, #tpu.memory_space<vmem>>, vector<2x8x32xf32>,
    return
  }
  func.func @transform_0(%arg0: i32) -> (i32, i32, i32) {
    %c0_i32 = arith.constant 0 : i32
    %c0_i32_0 = arith.constant 0 : i32
    %c0_i32_1 = arith.constant 0 : i32
    return %arg0, %c0_i32, %c0_i32_0 : i32, i32, i32
  }
  func.func @transform_1(%arg0: i32) -> (i32, i32) {
    %c0_i32 = arith.constant 0 : i32
    %c0_i32_0 = arith.constant 0 : i32
    %c0_i32_1 = arith.constant 0 : i32
    return %c0_i32, %c0_i32_0 : i32, i32
  }
  func.func @transform_2(%arg0: i32) -> (i32, i32) {
    %c0_i32 = arith.constant 0 : i32
    %c0_i32_0 = arith.constant 0 : i32
    %c0_i32_1 = arith.constant 0 : i32
    return %c0_i32, %c0_i32_0 : i32, i32
  }
  func.func @transform_3(%arg0: i32) -> (i32, i32) {
    %c0_i32 = arith.constant 0 : i32
    %c0_i32_0 = arith.constant 0 : i32
    %c0_i32_1 = arith.constant 0 : i32
    return %c0_i32, %c0_i32_0 : i32, i32
  }
  func.func @transform_4(%arg0: i32) -> (i32, i32) {
    %c0_i32 = arith.constant 0 : i32
    %c0_i32_0 = arith.constant 0 : i32
    %c0_i32_1 = arith.constant 0 : i32
    return %c0_i32, %c0_i32_0 : i32, i32
  }
  func.func @transform_5(%arg0: i32) -> (i32, i32, i32) {
    %c0_i32 = arith.constant 0 : i32
    %c0_i32_0 = arith.constant 0 : i32
    %c0_i32_1 = arith.constant 0 : i32
    return %arg0, %c0_i32, %c0_i32_0 : i32, i32, i32
  }
}

</mosaic_0001>

<llo_original>
// kernel: tpu_custom_call.1
$region0: #{tpu_custom_call.1}
  #allocation0 [shape = 'u32[]', space=smem, size = 0x4, offset = 0x4, fixed_abs, tag = 'smem constant byte address 0x4 - core index']
  #allocation1 [shape = 'u32[72,128]{1,0:T(1,128)}', space=vmem, size = 0x9000, scoped, tag = 'internal scratch']
  #allocation2 [shape = 'bf16[2,8,96]{2,1,0:T(8,128)(2,1)}', space=vmem, size = 0x1000, scoped, tag = 'scratch operand']
  #allocation3 [shape = 'bf16[2,8,32]{2,1,0:T(8,128)(2,1)}', space=vmem, size = 0x1000, scoped, tag = 'scratch operand']
  %s0 = inlined_call_operand.hbm [shape: bf16[2,8,32], index: 0, kind: input, shape index: {}]
  %s1 = inlined_call_operand.hbm [shape: bf16[32,96], index: 1, kind: input, shape index: {}]
  %s2 = inlined_call_operand.vmem [shape: f32[1,96], index: 2, kind: input, shape index: {}]
  %s3 = inlined_call_operand.hbm [shape: bf16[32,32], index: 3, kind: input, shape index: {}]
  %s4 = inlined_call_operand.vmem [shape: f32[1,32], index: 4, kind: input, shape index: {}]
  %s5 = inlined_call_operand.hbm [shape: f32[2,8,32], index: 5, kind: output, shape index: {}]
  %s6 = sld [smem:[#allocation0]]
  $region42: #{tpu_custom_call.1} parent=0
    _
  %s8 = ssub.s32 1, %s6
  %s9 = scalar_select 0, %s8, %s6
  $region1: #{tpu_custom_call.1} parent=0
    #allocation4 [shape = 'u8[4096]{0}', space=vmem, size = 0x1000, scoped, tag = 'input window, operand 0, single buffered']
    #allocation5 [shape = 's32[1]{0}', space=sflag, size = 0x4, scoped, tag = 'scoped memory for tpu_custom_call.1']
    #allocation6 [shape = 's32[1]{0}', space=sflag, size = 0x4, scoped, tag = 'scoped memory for tpu_custom_call.1']
    #allocation7 [shape = 'u8[8192]{0}', space=vmem, size = 0x2000, scoped, tag = 'input window, operand 1, single buffered']
    #allocation8 [shape = 's32[1]{0}', space=sflag, size = 0x4, scoped, tag = 'scoped memory for tpu_custom_call.1']
    #allocation9 [shape = 'u8[8192]{0}', space=vmem, size = 0x2000, scoped, tag = 'input window, operand 3, single buffered']
    #allocation10 [shape = 'u8[8192]{0}', space=vmem, size = 0x2000, scoped, tag = 'output window, operand 0, single buffered']
    %10 = vsyncpa [#allocation5], 0
    %11 = vsyncpa [#allocation8], 0
    %12 = vsyncpa [#allocation6], 0
    // Predicated region
    $region2: #{tpu_custom_call.1} parent=1 // pred_check
      _
    $region3: #{tpu_custom_call.1} parent=1 // pred_check_branch
      %14 = sbr.rel (0) target = $region5
    $region4: #{tpu_custom_call.1} parent=1 // pred_region
      %16 = vsyncadd [#allocation5], 0
      %s17 = sshll.u32 %s0, 4
      %s18 = int_to_ptr.hbm [resolvable:$true] %s17
      %s19 = sshll.u32 [#allocation4], 4
      %s20 = int_to_ptr.vmem [resolvable:$true] %s19
      %25 = dma.hbm_to_vmem [thread:$0]  %s18, 128, %s20, [#allocation5], 64, 64, 4
    $region5: #{tpu_custom_call.1} parent=1 // pred_fallthru
      _
    // Predicated region
    $region6: #{tpu_custom_call.1} parent=1 // pred_check
      _
    $region7: #{tpu_custom_call.1} parent=1 // pred_check_branch
      %27 = sbr.rel (0) target = $region9
    $region8: #{tpu_custom_call.1} parent=1 // pred_region
      %29 = vsyncadd [#allocation8], 0
      %s30 = sshll.u32 %s1, 4
      %s31 = int_to_ptr.hbm [resolvable:$true] %s30
      %s32 = sshll.u32 [#allocation7], 4
      %s33 = int_to_ptr.vmem [resolvable:$true] %s32
      %38 = dma.hbm_to_vmem [thread:$0]  %s31, 256, %s33, [#allocation8], 64, 64, 4
    $region9: #{tpu_custom_call.1} parent=1 // pred_fallthru
      _
    // Predicated region
    $region10: #{tpu_custom_call.1} parent=1 // pred_check
      _
    $region11: #{tpu_custom_call.1} parent=1 // pred_check_branch
      %40 = sbr.rel (0) target = $region13
    $region12: #{tpu_custom_call.1} parent=1 // pred_region
      _
    $region13: #{tpu_custom_call.1} parent=1 // pred_fallthru
      _
    // Predicated region
    $region14: #{tpu_custom_call.1} parent=1 // pred_check
      _
    $region15: #{tpu_custom_call.1} parent=1 // pred_check_branch
      %42 = sbr.rel (0) target = $region17
    $region16: #{tpu_custom_call.1} parent=1 // pred_region
      %44 = vsyncadd [#allocation8], 0
      %s45 = sshll.u32 %s3, 4
      %s46 = int_to_ptr.hbm [resolvable:$true] %s45
      %s47 = sshll.u32 [#allocation9], 4
      %s48 = int_to_ptr.vmem [resolvable:$true] %s47
      %53 = dma.hbm_to_vmem [thread:$0]  %s46, 256, %s48, [#allocation8], 64, 64, 4
    $region17: #{tpu_custom_call.1} parent=1 // pred_fallthru
      _
    // Predicated region
    $region18: #{tpu_custom_call.1} parent=1 // pred_check
      _
    $region19: #{tpu_custom_call.1} parent=1 // pred_check_branch
      %55 = sbr.rel (0) target = $region21
    $region20: #{tpu_custom_call.1} parent=1 // pred_region
      _
    $region21: #{tpu_custom_call.1} parent=1 // pred_fallthru
      _
    // Predicated region
    $region22: #{tpu_custom_call.1} parent=1 // pred_check
      _
    $region23: #{tpu_custom_call.1} parent=1 // pred_check_branch
      %57 = sbr.rel (0) target = $region25
    $region24: #{tpu_custom_call.1} parent=1 // pred_region
      %59 = dma.done [#allocation5], 128
    $region25: #{tpu_custom_call.1} parent=1 // pred_fallthru
      _
    // Predicated region
    $region26: #{tpu_custom_call.1} parent=1 // pred_check
      _
    $region27: #{tpu_custom_call.1} parent=1 // pred_check_branch
      %61 = sbr.rel (0) target = $region29
    $region28: #{tpu_custom_call.1} parent=1 // pred_region
      %63 = dma.done [#allocation8], 256
    $region29: #{tpu_custom_call.1} parent=1 // pred_fallthru
      _
    // Predicated region
    $region30: #{tpu_custom_call.1} parent=1 // pred_check
      _
    $region31: #{tpu_custom_call.1} parent=1 // pred_check_branch
      %65 = sbr.rel (0) target = $region33
    $region32: #{tpu_custom_call.1} parent=1 // pred_region
      %67 = dma.done [#allocation8], 256
    $region33: #{tpu_custom_call.1} parent=1 // pred_fallthru
      _
    %v69 = vld [vmem:[#allocation4] sm:$0xf]
    %v70 = vld [vmem:[#allocation4 + $0x4] sm:$0xf]
    %v71 = vld [vmem:[#allocation7] sm:$0xf]
    %v72 = vld [vmem:[#allocation7 + $0x4] sm:$0xf]
    %v73 = vld [vmem:[#allocation7 + $0x8] sm:$0xf]
    %v74 = vld [vmem:[#allocation7 + $0xc] sm:$0xf]
    %v75 = vld [vmem:[%s2] sm:$0x1]
    %v77 = vperm.slane %v75, 0
    %v81 = vunpack.c.l.b16 %v69
    %v82 = vunpack.c.l.b16 %v70
    %v83 = vpack.c.b16 %v82, %v81
    %v88 = vunpack.c.l.b16 %v71
    %v89 = vunpack.c.l.b16 %v72
    %v90 = vunpack.c.l.b16 %v73
    %v91 = vunpack.c.l.b16 %v74
    %v92 = vpack.c.b16 %v89, %v88
    %v93 = vpack.c.b16 %v91, %v90
    %vm96 = vcmask 261120
    %v98 = vsel %vm96, %v83, 0
    %100 = vmatpush.bf16.msra.mxu0 0
    %101 = vmatpush.bf16.msra.mxu0 0
    %102 = vmatpush.bf16.msra.mxu0 0
    %103 = vmatpush.bf16.msra.mxu0 0
    %104 = vmatpush.bf16.msra.mxu0 0
    %105 = vmatpush.bf16.msra.mxu0 0
    %106 = vmatpush.bf16.msra.mxu0 %v93
    %107 = vmatpush.bf16.msra.mxu0 %v92
    %108 = vmatmul.bf16.gmra.mxu0 %v98
    %v109 = vpop.f32.mrf.mxu0
    %v110 = vadd.f32 %v77, %v109
    %v111 = vpop.f32.mrf.mxu0
    %v112 = vadd.f32 %v77, %v111
    %113 = vdwg.mxu0
    %v114 = vpack.c.bf16 %v110, %v110
    %v115 = vpack.c.bf16 %v112, %v112
    %vm116 = vcmask 781312
    %117 = vst.msk [vmem:[#allocation2] sm:$0xf] %vm116, %v114
    %118 = vst.msk [vmem:[#allocation2 + $0x4] sm:$0xf] %vm116, %v115
    %v119 = vlaneseq
    %v120 = vshrl.u32 %v119, 7
    %v121 = vlaneseq
    %v122 = vand.u32 %v121, 127
    %vm123 = vcmp.ge.s32.totalorder %v120, %v122
    %v124 = vsel %vm123, 0.0, -1e+30
    %v125 = vld [vmem:[#allocation2] sm:$0xf]
    %v126 = vld [vmem:[#allocation2 + $0x4] sm:$0xf]
    %v128 = vunpack.c.l.b16 %v125
    %v129 = vpack.c.b16 %v128, %v128
    %130 = vrot.lane.b32.xlu0 %v129, 96
    %v131 = vpop.permute.xlu0 %130
    %vm132 = vcmask 31744
    %v134 = vsel %vm132, %v125, 0
    %v137 = vsel %vm132, %v131, 0
    %139 = vmatpush.bf16.xpose.msra.mxu0 0
    %140 = vmatpush.bf16.xpose.msra.mxu0 0
    %141 = vmatpush.bf16.xpose.msra.mxu0 0
    %142 = vmatpush.bf16.xpose.msra.mxu0 0
    %143 = vmatpush.bf16.xpose.msra.mxu0 0
    %144 = vmatpush.bf16.xpose.msra.mxu0 0
    %145 = vmatpush.bf16.xpose.msra.mxu0 0
    %146 = vmatpush.bf16.xpose.msra.mxu0 %v137
    %147 = vmatmul.bf16.gmra.mxu0 %v134
    %v148 = vpop.f32.mrf.mxu0
    %v149 = vadd.f32 %v124, %v148
    %v150 = vpop.f32.mrf.mxu0
    %151 = vdwg.mxu0
    %v153 = vunpack.c.l.b16 %v126
    %v154 = vpack.c.b16 %v153, %v153
    %155 = vrot.lane.b32.xlu0 %v154, 96
    %v156 = vpop.permute.xlu0 %155
    %v158 = vsel %vm132, %v126, 0
    %v161 = vsel %vm132, %v156, 0
    %163 = vmatpush.bf16.xpose.msra.mxu0 0
    %164 = vmatpush.bf16.xpose.msra.mxu0 0
    %165 = vmatpush.bf16.xpose.msra.mxu0 0
    %166 = vmatpush.bf16.xpose.msra.mxu0 0
    %167 = vmatpush.bf16.xpose.msra.mxu0 0
    %168 = vmatpush.bf16.xpose.msra.mxu0 0
    %169 = vmatpush.bf16.xpose.msra.mxu0 0
    %170 = vmatpush.bf16.xpose.msra.mxu0 %v161
    %171 = vmatmul.bf16.gmra.mxu0 %v158
    %v172 = vpop.f32.mrf.mxu0
    %v173 = vadd.f32 %v124, %v172
    %v174 = vpop.f32.mrf.mxu0
    %175 = vdwg.mxu0
    %vm176 = vcmask 64512
    %v177 = vsel %vm176, %v149, -inf
    %178 = vmax.xlane.f32.xlu0 %v177
    %v179 = vpop.xlane.xlu0 %178
    %v180 = vsel %vm176, %v173, -inf
    %181 = vmax.xlane.f32.xlu0 %v180
    %v182 = vpop.xlane.xlu0 %181
    %v183 = vsub.f32 %v149, %v179
    %v184 = vsub.f32 %v173, %v182
    %v185 = vmul.f32 %v183, 1.442695
    %v186 = vpow.pop %v185
    %v187 = vmul.f32 %v184, 1.442695
    %v188 = vpow.pop %v187
    %v189 = vsel %vm176, %v186, 0.0
    %190 = vadd.xlane.f32.xlu0 %v189
    %v191 = vpop.xlane.xlu0 %190
    %v192 = vsel %vm176, %v188, 0.0
    %193 = vadd.xlane.f32.xlu0 %v192
    %v194 = vpop.xlane.xlu0 %193
    %v195 = vrcp.pop %v191
    %v196 = vrcp.pop %v194
    %v197 = vmul.f32 %v186, %v195
    %v198 = vmul.f32 %v188, %v196
    %v199 = vpack.c.bf16 %v197, %v197
    %v200 = vpack.c.bf16 %v198, %v198
    %201 = vrot.lane.b32.xlu0 %v129, 64
    %v202 = vpop.permute.xlu0 %201
    %v204 = vsel %vm176, %v199, 0
    %vm206 = vcmask 1043456
    %v208 = vsel %vm206, %v202, 0
    %210 = vmatpush.bf16.msra.mxu0 0
    %211 = vmatpush.bf16.msra.mxu0 0
    %212 = vmatpush.bf16.msra.mxu0 0
    %213 = vmatpush.bf16.msra.mxu0 0
    %214 = vmatpush.bf16.msra.mxu0 0
    %215 = vmatpush.bf16.msra.mxu0 0
    %216 = vmatpush.bf16.msra.mxu0 0
    %217 = vmatpush.bf16.msra.mxu0 %v208
    %218 = vmatmul.bf16.gmra.mxu0 %v204
    %v219 = vpop.f32.mrf.mxu0
    %v220 = vadd.f32 0.0, %v219
    %v221 = vpop.f32.mrf.mxu0
    %222 = vdwg.mxu0
    %223 = vrot.lane.b32.xlu0 %v154, 64
    %v224 = vpop.permute.xlu0 %223
    %v226 = vsel %vm176, %v200, 0
    %v229 = vsel %vm206, %v224, 0
    %231 = vmatpush.bf16.msra.mxu0 0
    %232 = vmatpush.bf16.msra.mxu0 0
    %233 = vmatpush.bf16.msra.mxu0 0
    %234 = vmatpush.bf16.msra.mxu0 0
    %235 = vmatpush.bf16.msra.mxu0 0
    %236 = vmatpush.bf16.msra.mxu0 0
    %237 = vmatpush.bf16.msra.mxu0 0
    %238 = vmatpush.bf16.msra.mxu0 %v229
    %239 = vmatmul.bf16.gmra.mxu0 %v226
    %v240 = vpop.f32.mrf.mxu0
    %v241 = vadd.f32 0.0, %v240
    %v242 = vpop.f32.mrf.mxu0
    %243 = vdwg.mxu0
    %v244 = vpack.c.bf16 %v220, %v220
    %v245 = vpack.c.bf16 %v241, %v241
    %vm246 = vcmask 27648
    %247 = vst.msk [vmem:[#allocation3] sm:$0xf] %vm246, %v244
    %248 = vst.msk [vmem:[#allocation3 + $0x4] sm:$0xf] %vm246, %v245
    %v249 = vld [vmem:[#allocation2] sm:$0xf]
    %v250 = vld [vmem:[#allocation2 + $0x4] sm:$0xf]
    %v252 = vunpack.c.l.b16 %v249
    %v253 = vpack.c.b16 %v252, %v252
    %254 = vrot.lane.b32.xlu0 %v253, 124
    %v255 = vpop.permute.xlu0 %254
    %256 = vrot.lane.b32.xlu0 %v253, 92
    %v257 = vpop.permute.xlu0 %256
    %v259 = vsel %vm132, %v255, 0
    %v262 = vsel %vm132, %v257, 0
    %264 = vmatpush.bf16.xpose.msra.mxu0 0
    %265 = vmatpush.bf16.xpose.msra.mxu0 0
    %266 = vmatpush.bf16.xpose.msra.mxu0 0
    %267 = vmatpush.bf16.xpose.msra.mxu0 0
    %268 = vmatpush.bf16.xpose.msra.mxu0 0
    %269 = vmatpush.bf16.xpose.msra.mxu0 0
    %270 = vmatpush.bf16.xpose.msra.mxu0 0
    %271 = vmatpush.bf16.xpose.msra.mxu0 %v262
    %272 = vmatmul.bf16.gmra.mxu0 %v259
    %v273 = vpop.f32.mrf.mxu0
    %v274 = vadd.f32 %v124, %v273
    %v275 = vpop.f32.mrf.mxu0
    %276 = vdwg.mxu0
    %v278 = vunpack.c.l.b16 %v250
    %v279 = vpack.c.b16 %v278, %v278
    %280 = vrot.lane.b32.xlu0 %v279, 124
    %v281 = vpop.permute.xlu0 %280
    %282 = vrot.lane.b32.xlu0 %v279, 92
    %v283 = vpop.permute.xlu0 %282
    %v285 = vsel %vm132, %v281, 0
    %v288 = vsel %vm132, %v283, 0
    %290 = vmatpush.bf16.xpose.msra.mxu0 0
    %291 = vmatpush.bf16.xpose.msra.mxu0 0
    %292 = vmatpush.bf16.xpose.msra.mxu0 0
    %293 = vmatpush.bf16.xpose.msra.mxu0 0
    %294 = vmatpush.bf16.xpose.msra.mxu0 0
    %295 = vmatpush.bf16.xpose.msra.mxu0 0
    %296 = vmatpush.bf16.xpose.msra.mxu0 0
    %297 = vmatpush.bf16.xpose.msra.mxu0 %v288
    %298 = vmatmul.bf16.gmra.mxu0 %v285
    %v299 = vpop.f32.mrf.mxu0
    %v300 = vadd.f32 %v124, %v299
    %v301 = vpop.f32.mrf.mxu0
    %302 = vdwg.mxu0
    %v303 = vsel %vm176, %v274, -inf
    %304 = vmax.xlane.f32.xlu0 %v303
    %v305 = vpop.xlane.xlu0 %304
    %v306 = vsel %vm176, %v300, -inf
    %307 = vmax.xlane.f32.xlu0 %v306
    %v308 = vpop.xlane.xlu0 %307
    %v309 = vsub.f32 %v274, %v305
    %v310 = vsub.f32 %v300, %v308
    %v311 = vmul.f32 %v309, 1.442695
    %v312 = vpow.pop %v311
    %v313 = vmul.f32 %v310, 1.442695
    %v314 = vpow.pop %v313
    %v315 = vsel %vm176, %v312, 0.0
    %316 = vadd.xlane.f32.xlu0 %v315
    %v317 = vpop.xlane.xlu0 %316
    %v318 = vsel %vm176, %v314, 0.0
    %319 = vadd.xlane.f32.xlu0 %v318
    %v320 = vpop.xlane.xlu0 %319
    %v321 = vrcp.pop %v317
    %v322 = vrcp.pop %v320
    %v323 = vmul.f32 %v312, %v321
    %v324 = vmul.f32 %v314, %v322
    %v325 = vpack.c.bf16 %v323, %v323
    %v326 = vpack.c.bf16 %v324, %v324
    %327 = vrot.lane.b32.xlu0 %v253, 60
    %v328 = vpop.permute.xlu0 %327
    %v330 = vsel %vm176, %v325, 0
    %v333 = vsel %vm206, %v328, 0
    %335 = vmatpush.bf16.msra.mxu0 0
    %336 = vmatpush.bf16.msra.mxu0 0
    %337 = vmatpush.bf16.msra.mxu0 0
    %338 = vmatpush.bf16.msra.mxu0 0
    %339 = vmatpush.bf16.msra.mxu0 0
    %340 = vmatpush.bf16.msra.mxu0 0
    %341 = vmatpush.bf16.msra.mxu0 0
    %342 = vmatpush.bf16.msra.mxu0 %v333
    %343 = vmatmul.bf16.gmra.mxu0 %v330
    %v344 = vpop.f32.mrf.mxu0
    %v345 = vadd.f32 0.0, %v344
    %v346 = vpop.f32.mrf.mxu0
    %347 = vdwg.mxu0
    %348 = vrot.lane.b32.xlu0 %v279, 60
    %v349 = vpop.permute.xlu0 %348
    %v351 = vsel %vm176, %v326, 0
    %v354 = vsel %vm206, %v349, 0
    %356 = vmatpush.bf16.msra.mxu0 0
    %357 = vmatpush.bf16.msra.mxu0 0
    %358 = vmatpush.bf16.msra.mxu0 0
    %359 = vmatpush.bf16.msra.mxu0 0
    %360 = vmatpush.bf16.msra.mxu0 0
    %361 = vmatpush.bf16.msra.mxu0 0
    %362 = vmatpush.bf16.msra.mxu0 0
    %363 = vmatpush.bf16.msra.mxu0 %v354
    %364 = vmatmul.bf16.gmra.mxu0 %v351
    %v365 = vpop.f32.mrf.mxu0
    %v366 = vadd.f32 0.0, %v365
    %v367 = vpop.f32.mrf.mxu0
    %368 = vdwg.mxu0
    %v369 = vpack.c.bf16 %v345, %v345
    %v370 = vpack.c.bf16 %v366, %v366
    %373 = vrot.lane.b32.xlu0 %v369, 4
    %v374 = vpop.permute.xlu0 %373
    %375 = vrot.lane.b32.xlu0 %v370, 4
    %v376 = vpop.permute.xlu0 %375
    %vm379 = vcmask 60448
    %380 = vst.msk [vmem:[#allocation3] sm:$0xf] %vm379, %v374
    %381 = vst.msk [vmem:[#allocation3 + $0x4] sm:$0xf] %vm379, %v376
    %v382 = vld [vmem:[#allocation2] sm:$0xf]
    %v383 = vld [vmem:[#allocation2 + $0x4] sm:$0xf]
    %v385 = vunpack.c.l.b16 %v382
    %v386 = vpack.c.b16 %v385, %v385
    %387 = vrot.lane.b32.xlu0 %v386, 120
    %v388 = vpop.permute.xlu0 %387
    %389 = vrot.lane.b32.xlu0 %v386, 88
    %v390 = vpop.permute.xlu0 %389
    %v392 = vsel %vm132, %v388, 0
    %v395 = vsel %vm132, %v390, 0
    %397 = vmatpush.bf16.xpose.msra.mxu0 0
    %398 = vmatpush.bf16.xpose.msra.mxu0 0
    %399 = vmatpush.bf16.xpose.msra.mxu0 0
    %400 = vmatpush.bf16.xpose.msra.mxu0 0
    %401 = vmatpush.bf16.xpose.msra.mxu0 0
    %402 = vmatpush.bf16.xpose.msra.mxu0 0
    %403 = vmatpush.bf16.xpose.msra.mxu0 0
    %404 = vmatpush.bf16.xpose.msra.mxu0 %v395
    %405 = vmatmul.bf16.gmra.mxu0 %v392
    %v406 = vpop.f32.mrf.mxu0
    %v407 = vadd.f32 %v124, %v406
    %v408 = vpop.f32.mrf.mxu0
    %409 = vdwg.mxu0
    %v411 = vunpack.c.l.b16 %v383
    %v412 = vpack.c.b16 %v411, %v411
    %413 = vrot.lane.b32.xlu0 %v412, 120
    %v414 = vpop.permute.xlu0 %413
    %415 = vrot.lane.b32.xlu0 %v412, 88
    %v416 = vpop.permute.xlu0 %415
    %v418 = vsel %vm132, %v414, 0
    %v421 = vsel %vm132, %v416, 0
    %423 = vmatpush.bf16.xpose.msra.mxu0 0
    %424 = vmatpush.bf16.xpose.msra.mxu0 0
    %425 = vmatpush.bf16.xpose.msra.mxu0 0
    %426 = vmatpush.bf16.xpose.msra.mxu0 0
    %427 = vmatpush.bf16.xpose.msra.mxu0 0
    %428 = vmatpush.bf16.xpose.msra.mxu0 0
    %429 = vmatpush.bf16.xpose.msra.mxu0 0
    %430 = vmatpush.bf16.xpose.msra.mxu0 %v421
    %431 = vmatmul.bf16.gmra.mxu0 %v418
    %v432 = vpop.f32.mrf.mxu0
    %v433 = vadd.f32 %v124, %v432
    %v434 = vpop.f32.mrf.mxu0
    %435 = vdwg.mxu0
    %v436 = vsel %vm176, %v407, -inf
    %437 = vmax.xlane.f32.xlu0 %v436
    %v438 = vpop.xlane.xlu0 %437
    %v439 = vsel %vm176, %v433, -inf
    %440 = vmax.xlane.f32.xlu0 %v439
    %v441 = vpop.xlane.xlu0 %440
    %v442 = vsub.f32 %v407, %v438
    %v443 = vsub.f32 %v433, %v441
    %v444 = vmul.f32 %v442, 1.442695
    %v445 = vpow.pop %v444
    %v446 = vmul.f32 %v443, 1.442695
    %v447 = vpow.pop %v446
    %v448 = vsel %vm176, %v445, 0.0
    %449 = vadd.xlane.f32.xlu0 %v448
    %v450 = vpop.xlane.xlu0 %449
    %v451 = vsel %vm176, %v447, 0.0
    %452 = vadd.xlane.f32.xlu0 %v451
    %v453 = vpop.xlane.xlu0 %452
    %v454 = vrcp.pop %v450
    %v455 = vrcp.pop %v453
    %v456 = vmul.f32 %v445, %v454
    %v457 = vmul.f32 %v447, %v455
    %v458 = vpack.c.bf16 %v456, %v456
    %v459 = vpack.c.bf16 %v457, %v457
    %460 = vrot.lane.b32.xlu0 %v386, 56
    %v461 = vpop.permute.xlu0 %460
    %v463 = vsel %vm176, %v458, 0
    %v466 = vsel %vm206, %v461, 0
    %468 = vmatpush.bf16.msra.mxu0 0
    %469 = vmatpush.bf16.msra.mxu0 0
    %470 = vmatpush.bf16.msra.mxu0 0
    %471 = vmatpush.bf16.msra.mxu0 0
    %472 = vmatpush.bf16.msra.mxu0 0
    %473 = vmatpush.bf16.msra.mxu0 0
    %474 = vmatpush.bf16.msra.mxu0 0
    %475 = vmatpush.bf16.msra.mxu0 %v466
    %476 = vmatmul.bf16.gmra.mxu0 %v463
    %v477 = vpop.f32.mrf.mxu0
    %v478 = vadd.f32 0.0, %v477
    %v479 = vpop.f32.mrf.mxu0
    %480 = vdwg.mxu0
    %481 = vrot.lane.b32.xlu0 %v412, 56
    %v482 = vpop.permute.xlu0 %481
    %v484 = vsel %vm176, %v459, 0
    %v487 = vsel %vm206, %v482, 0
    %489 = vmatpush.bf16.msra.mxu0 0
    %490 = vmatpush.bf16.msra.mxu0 0
    %491 = vmatpush.bf16.msra.mxu0 0
    %492 = vmatpush.bf16.msra.mxu0 0
    %493 = vmatpush.bf16.msra.mxu0 0
    %494 = vmatpush.bf16.msra.mxu0 0
    %495 = vmatpush.bf16.msra.mxu0 0
    %496 = vmatpush.bf16.msra.mxu0 %v487
    %497 = vmatmul.bf16.gmra.mxu0 %v484
    %v498 = vpop.f32.mrf.mxu0
    %v499 = vadd.f32 0.0, %v498
    %v500 = vpop.f32.mrf.mxu0
    %501 = vdwg.mxu0
    %v502 = vpack.c.bf16 %v478, %v478
    %v503 = vpack.c.bf16 %v499, %v499
    %506 = vrot.lane.b32.xlu0 %v502, 8
    %v507 = vpop.permute.xlu0 %506
    %508 = vrot.lane.b32.xlu0 %v503, 8
    %v509 = vpop.permute.xlu0 %508
    %vm512 = vcmask 93248
    %513 = vst.msk [vmem:[#allocation3] sm:$0xf] %vm512, %v507
    %514 = vst.msk [vmem:[#allocation3 + $0x4] sm:$0xf] %vm512, %v509
    %v515 = vld [vmem:[#allocation2] sm:$0xf]
    %v516 = vld [vmem:[#allocation2 + $0x4] sm:$0xf]
    %v518 = vunpack.c.l.b16 %v515
    %v519 = vpack.c.b16 %v518, %v518
    %520 = vrot.lane.b32.xlu0 %v519, 116
    %v521 = vpop.permute.xlu0 %520
    %522 = vrot.lane.b32.xlu0 %v519, 84
    %v523 = vpop.permute.xlu0 %522
    %v525 = vsel %vm132, %v521, 0
    %v528 = vsel %vm132, %v523, 0
    %530 = vmatpush.bf16.xpose.msra.mxu0 0
    %531 = vmatpush.bf16.xpose.msra.mxu0 0
    %532 = vmatpush.bf16.xpose.msra.mxu0 0
    %533 = vmatpush.bf16.xpose.msra.mxu0 0
    %534 = vmatpush.bf16.xpose.msra.mxu0 0
    %535 = vmatpush.bf16.xpose.msra.mxu0 0
    %536 = vmatpush.bf16.xpose.msra.mxu0 0
    %537 = vmatpush.bf16.xpose.msra.mxu0 %v528
    %538 = vmatmul.bf16.gmra.mxu0 %v525
    %v539 = vpop.f32.mrf.mxu0
    %v540 = vadd.f32 %v124, %v539
    %v541 = vpop.f32.mrf.mxu0
    %542 = vdwg.mxu0
    %v544 = vunpack.c.l.b16 %v516
    %v545 = vpack.c.b16 %v544, %v544
    %546 = vrot.lane.b32.xlu0 %v545, 116
    %v547 = vpop.permute.xlu0 %546
    %548 = vrot.lane.b32.xlu0 %v545, 84
    %v549 = vpop.permute.xlu0 %548
    %v551 = vsel %vm132, %v547, 0
    %v554 = vsel %vm132, %v549, 0
    %556 = vmatpush.bf16.xpose.msra.mxu0 0
    %557 = vmatpush.bf16.xpose.msra.mxu0 0
    %558 = vmatpush.bf16.xpose.msra.mxu0 0
    %559 = vmatpush.bf16.xpose.msra.mxu0 0
    %560 = vmatpush.bf16.xpose.msra.mxu0 0
    %561 = vmatpush.bf16.xpose.msra.mxu0 0
    %562 = vmatpush.bf16.xpose.msra.mxu0 0
    %563 = vmatpush.bf16.xpose.msra.mxu0 %v554
    %564 = vmatmul.bf16.gmra.mxu0 %v551
    %v565 = vpop.f32.mrf.mxu0
    %v566 = vadd.f32 %v124, %v565
    %v567 = vpop.f32.mrf.mxu0
    %568 = vdwg.mxu0
    %v569 = vsel %vm176, %v540, -inf
    %570 = vmax.xlane.f32.xlu0 %v569
    %v571 = vpop.xlane.xlu0 %570
    %v572 = vsel %vm176, %v566, -inf
    %573 = vmax.xlane.f32.xlu0 %v572
    %v574 = vpop.xlane.xlu0 %573
    %v575 = vsub.f32 %v540, %v571
    %v576 = vsub.f32 %v566, %v574
    %v577 = vmul.f32 %v575, 1.442695
    %v578 = vpow.pop %v577
    %v579 = vmul.f32 %v576, 1.442695
    %v580 = vpow.pop %v579
    %v581 = vsel %vm176, %v578, 0.0
    %582 = vadd.xlane.f32.xlu0 %v581
    %v583 = vpop.xlane.xlu0 %582
    %v584 = vsel %vm176, %v580, 0.0
    %585 = vadd.xlane.f32.xlu0 %v584
    %v586 = vpop.xlane.xlu0 %585
    %v587 = vrcp.pop %v583
    %v588 = vrcp.pop %v586
    %v589 = vmul.f32 %v578, %v587
    %v590 = vmul.f32 %v580, %v588
    %v591 = vpack.c.bf16 %v589, %v589
    %v592 = vpack.c.bf16 %v590, %v590
    %593 = vrot.lane.b32.xlu0 %v519, 52
    %v594 = vpop.permute.xlu0 %593
    %v596 = vsel %vm176, %v591, 0
    %v599 = vsel %vm206, %v594, 0
    %601 = vmatpush.bf16.msra.mxu0 0
    %602 = vmatpush.bf16.msra.mxu0 0
    %603 = vmatpush.bf16.msra.mxu0 0
    %604 = vmatpush.bf16.msra.mxu0 0
    %605 = vmatpush.bf16.msra.mxu0 0
    %606 = vmatpush.bf16.msra.mxu0 0
    %607 = vmatpush.bf16.msra.mxu0 0
    %608 = vmatpush.bf16.msra.mxu0 %v599
    %609 = vmatmul.bf16.gmra.mxu0 %v596
    %v610 = vpop.f32.mrf.mxu0
    %v611 = vadd.f32 0.0, %v610
    %v612 = vpop.f32.mrf.mxu0
    %613 = vdwg.mxu0
    %614 = vrot.lane.b32.xlu0 %v545, 52
    %v615 = vpop.permute.xlu0 %614
    %v617 = vsel %vm176, %v592, 0
    %v620 = vsel %vm206, %v615, 0
    %622 = vmatpush.bf16.msra.mxu0 0
    %623 = vmatpush.bf16.msra.mxu0 0
    %624 = vmatpush.bf16.msra.mxu0 0
    %625 = vmatpush.bf16.msra.mxu0 0
    %626 = vmatpush.bf16.msra.mxu0 0
    %627 = vmatpush.bf16.msra.mxu0 0
    %628 = vmatpush.bf16.msra.mxu0 0
    %629 = vmatpush.bf16.msra.mxu0 %v620
    %630 = vmatmul.bf16.gmra.mxu0 %v617
    %v631 = vpop.f32.mrf.mxu0
    %v632 = vadd.f32 0.0, %v631
    %v633 = vpop.f32.mrf.mxu0
    %634 = vdwg.mxu0
    %v635 = vpack.c.bf16 %v611, %v611
    %v636 = vpack.c.bf16 %v632, %v632
    %639 = vrot.lane.b32.xlu0 %v635, 12
    %v640 = vpop.permute.xlu0 %639
    %641 = vrot.lane.b32.xlu0 %v636, 12
    %v642 = vpop.permute.xlu0 %641
    %vm645 = vcmask 126048
    %646 = vst.msk [vmem:[#allocation3] sm:$0xf] %vm645, %v640
    %647 = vst.msk [vmem:[#allocation3 + $0x4] sm:$0xf] %vm645, %v642
    %v648 = vld [vmem:[#allocation2] sm:$0xf]
    %v649 = vld [vmem:[#allocation2 + $0x4] sm:$0xf]
    %v651 = vunpack.c.l.b16 %v648
    %v652 = vpack.c.b16 %v651, %v651
    %653 = vrot.lane.b32.xlu0 %v652, 112
    %v654 = vpop.permute.xlu0 %653
    %655 = vrot.lane.b32.xlu0 %v652, 80
    %v656 = vpop.permute.xlu0 %655
    %v658 = vsel %vm132, %v654, 0
    %v661 = vsel %vm132, %v656, 0
    %663 = vmatpush.bf16.xpose.msra.mxu0 0
    %664 = vmatpush.bf16.xpose.msra.mxu0 0
    %665 = vmatpush.bf16.xpose.msra.mxu0 0
    %666 = vmatpush.bf16.xpose.msra.mxu0 0
    %667 = vmatpush.bf16.xpose.msra.mxu0 0
    %668 = vmatpush.bf16.xpose.msra.mxu0 0
    %669 = vmatpush.bf16.xpose.msra.mxu0 0
    %670 = vmatpush.bf16.xpose.msra.mxu0 %v661
    %671 = vmatmul.bf16.gmra.mxu0 %v658
    %v672 = vpop.f32.mrf.mxu0
    %v673 = vadd.f32 %v124, %v672
    %v674 = vpop.f32.mrf.mxu0
    %675 = vdwg.mxu0
    %v677 = vunpack.c.l.b16 %v649
    %v678 = vpack.c.b16 %v677, %v677
    %679 = vrot.lane.b32.xlu0 %v678, 112
    %v680 = vpop.permute.xlu0 %679
    %681 = vrot.lane.b32.xlu0 %v678, 80
    %v682 = vpop.permute.xlu0 %681
    %v684 = vsel %vm132, %v680, 0
    %v687 = vsel %vm132, %v682, 0
    %689 = vmatpush.bf16.xpose.msra.mxu0 0
    %690 = vmatpush.bf16.xpose.msra.mxu0 0
    %691 = vmatpush.bf16.xpose.msra.mxu0 0
    %692 = vmatpush.bf16.xpose.msra.mxu0 0
    %693 = vmatpush.bf16.xpose.msra.mxu0 0
    %694 = vmatpush.bf16.xpose.msra.mxu0 0
    %695 = vmatpush.bf16.xpose.msra.mxu0 0
    %696 = vmatpush.bf16.xpose.msra.mxu0 %v687
    %697 = vmatmul.bf16.gmra.mxu0 %v684
    %v698 = vpop.f32.mrf.mxu0
    %v699 = vadd.f32 %v124, %v698
    %v700 = vpop.f32.mrf.mxu0
    %701 = vdwg.mxu0
    %v702 = vsel %vm176, %v673, -inf
    %703 = vmax.xlane.f32.xlu0 %v702
    %v704 = vpop.xlane.xlu0 %703
    %v705 = vsel %vm176, %v699, -inf
    %706 = vmax.xlane.f32.xlu0 %v705
    %v707 = vpop.xlane.xlu0 %706
    %v708 = vsub.f32 %v673, %v704
    %v709 = vsub.f32 %v699, %v707
    %v710 = vmul.f32 %v708, 1.442695
    %v711 = vpow.pop %v710
    %v712 = vmul.f32 %v709, 1.442695
    %v713 = vpow.pop %v712
    %v714 = vsel %vm176, %v711, 0.0
    %715 = vadd.xlane.f32.xlu0 %v714
    %v716 = vpop.xlane.xlu0 %715
    %v717 = vsel %vm176, %v713, 0.0
    %718 = vadd.xlane.f32.xlu0 %v717
    %v719 = vpop.xlane.xlu0 %718
    %v720 = vrcp.pop %v716
    %v721 = vrcp.pop %v719
    %v722 = vmul.f32 %v711, %v720
    %v723 = vmul.f32 %v713, %v721
    %v724 = vpack.c.bf16 %v722, %v722
    %v725 = vpack.c.bf16 %v723, %v723
    %726 = vrot.lane.b32.xlu0 %v652, 48
    %v727 = vpop.permute.xlu0 %726
    %v729 = vsel %vm176, %v724, 0
    %v732 = vsel %vm206, %v727, 0
    %734 = vmatpush.bf16.msra.mxu0 0
    %735 = vmatpush.bf16.msra.mxu0 0
    %736 = vmatpush.bf16.msra.mxu0 0
    %737 = vmatpush.bf16.msra.mxu0 0
    %738 = vmatpush.bf16.msra.mxu0 0
    %739 = vmatpush.bf16.msra.mxu0 0
    %740 = vmatpush.bf16.msra.mxu0 0
    %741 = vmatpush.bf16.msra.mxu0 %v732
    %742 = vmatmul.bf16.gmra.mxu0 %v729
    %v743 = vpop.f32.mrf.mxu0
    %v744 = vadd.f32 0.0, %v743
    %v745 = vpop.f32.mrf.mxu0
    %746 = vdwg.mxu0
    %747 = vrot.lane.b32.xlu0 %v678, 48
    %v748 = vpop.permute.xlu0 %747
    %v750 = vsel %vm176, %v725, 0
    %v753 = vsel %vm206, %v748, 0
    %755 = vmatpush.bf16.msra.mxu0 0
    %756 = vmatpush.bf16.msra.mxu0 0
    %757 = vmatpush.bf16.msra.mxu0 0
    %758 = vmatpush.bf16.msra.mxu0 0
    %759 = vmatpush.bf16.msra.mxu0 0
    %760 = vmatpush.bf16.msra.mxu0 0
    %761 = vmatpush.bf16.msra.mxu0 0
    %762 = vmatpush.bf16.msra.mxu0 %v753
    %763 = vmatmul.bf16.gmra.mxu0 %v750
    %v764 = vpop.f32.mrf.mxu0
    %v765 = vadd.f32 0.0, %v764
    %v766 = vpop.f32.mrf.mxu0
    %767 = vdwg.mxu0
    %v768 = vpack.c.bf16 %v744, %v744
    %v769 = vpack.c.bf16 %v765, %v765
    %772 = vrot.lane.b32.xlu0 %v768, 16
    %v773 = vpop.permute.xlu0 %772
    %774 = vrot.lane.b32.xlu0 %v769, 16
    %v775 = vpop.permute.xlu0 %774
    %vm778 = vcmask 158848
    %779 = vst.msk [vmem:[#allocation3] sm:$0xf] %vm778, %v773
    %780 = vst.msk [vmem:[#allocation3 + $0x4] sm:$0xf] %vm778, %v775
    %v781 = vld [vmem:[#allocation2] sm:$0xf]
    %v782 = vld [vmem:[#allocation2 + $0x4] sm:$0xf]
    %v784 = vunpack.c.l.b16 %v781
    %v785 = vpack.c.b16 %v784, %v784
    %786 = vrot.lane.b32.xlu0 %v785, 108
    %v787 = vpop.permute.xlu0 %786
    %788 = vrot.lane.b32.xlu0 %v785, 76
    %v789 = vpop.permute.xlu0 %788
    %v791 = vsel %vm132, %v787, 0
    %v794 = vsel %vm132, %v789, 0
    %796 = vmatpush.bf16.xpose.msra.mxu0 0
    %797 = vmatpush.bf16.xpose.msra.mxu0 0
    %798 = vmatpush.bf16.xpose.msra.mxu0 0
    %799 = vmatpush.bf16.xpose.msra.mxu0 0
    %800 = vmatpush.bf16.xpose.msra.mxu0 0
    %801 = vmatpush.bf16.xpose.msra.mxu0 0
    %802 = vmatpush.bf16.xpose.msra.mxu0 0
    %803 = vmatpush.bf16.xpose.msra.mxu0 %v794
    %804 = vmatmul.bf16.gmra.mxu0 %v791
    %v805 = vpop.f32.mrf.mxu0
    %v806 = vadd.f32 %v124, %v805
    %v807 = vpop.f32.mrf.mxu0
    %808 = vdwg.mxu0
    %v810 = vunpack.c.l.b16 %v782
    %v811 = vpack.c.b16 %v810, %v810
    %812 = vrot.lane.b32.xlu0 %v811, 108
    %v813 = vpop.permute.xlu0 %812
    %814 = vrot.lane.b32.xlu0 %v811, 76
    %v815 = vpop.permute.xlu0 %814
    %v817 = vsel %vm132, %v813, 0
    %v820 = vsel %vm132, %v815, 0
    %822 = vmatpush.bf16.xpose.msra.mxu0 0
    %823 = vmatpush.bf16.xpose.msra.mxu0 0
    %824 = vmatpush.bf16.xpose.msra.mxu0 0
    %825 = vmatpush.bf16.xpose.msra.mxu0 0
    %826 = vmatpush.bf16.xpose.msra.mxu0 0
    %827 = vmatpush.bf16.xpose.msra.mxu0 0
    %828 = vmatpush.bf16.xpose.msra.mxu0 0
    %829 = vmatpush.bf16.xpose.msra.mxu0 %v820
    %830 = vmatmul.bf16.gmra.mxu0 %v817
    %v831 = vpop.f32.mrf.mxu0
    %v832 = vadd.f32 %v124, %v831
    %v833 = vpop.f32.mrf.mxu0
    %834 = vdwg.mxu0
    %v835 = vsel %vm176, %v806, -inf
    %836 = vmax.xlane.f32.xlu0 %v835
    %v837 = vpop.xlane.xlu0 %836
    %v838 = vsel %vm176, %v832, -inf
    %839 = vmax.xlane.f32.xlu0 %v838
    %v840 = vpop.xlane.xlu0 %839
    %v841 = vsub.f32 %v806, %v837
    %v842 = vsub.f32 %v832, %v840
    %v843 = vmul.f32 %v841, 1.442695
    %v844 = vpow.pop %v843
    %v845 = vmul.f32 %v842, 1.442695
    %v846 = vpow.pop %v845
    %v847 = vsel %vm176, %v844, 0.0
    %848 = vadd.xlane.f32.xlu0 %v847
    %v849 = vpop.xlane.xlu0 %848
    %v850 = vsel %vm176, %v846, 0.0
    %851 = vadd.xlane.f32.xlu0 %v850
    %v852 = vpop.xlane.xlu0 %851
    %v853 = vrcp.pop %v849
    %v854 = vrcp.pop %v852
    %v855 = vmul.f32 %v844, %v853
    %v856 = vmul.f32 %v846, %v854
    %v857 = vpack.c.bf16 %v855, %v855
    %v858 = vpack.c.bf16 %v856, %v856
    %859 = vrot.lane.b32.xlu0 %v785, 44
    %v860 = vpop.permute.xlu0 %859
    %v862 = vsel %vm176, %v857, 0
    %v865 = vsel %vm206, %v860, 0
    %867 = vmatpush.bf16.msra.mxu0 0
    %868 = vmatpush.bf16.msra.mxu0 0
    %869 = vmatpush.bf16.msra.mxu0 0
    %870 = vmatpush.bf16.msra.mxu0 0
    %871 = vmatpush.bf16.msra.mxu0 0
    %872 = vmatpush.bf16.msra.mxu0 0
    %873 = vmatpush.bf16.msra.mxu0 0
    %874 = vmatpush.bf16.msra.mxu0 %v865
    %875 = vmatmul.bf16.gmra.mxu0 %v862
    %v876 = vpop.f32.mrf.mxu0
    %v877 = vadd.f32 0.0, %v876
    %v878 = vpop.f32.mrf.mxu0
    %879 = vdwg.mxu0
    %880 = vrot.lane.b32.xlu0 %v811, 44
    %v881 = vpop.permute.xlu0 %880
    %v883 = vsel %vm176, %v858, 0
    %v886 = vsel %vm206, %v881, 0
    %888 = vmatpush.bf16.msra.mxu0 0
    %889 = vmatpush.bf16.msra.mxu0 0
    %890 = vmatpush.bf16.msra.mxu0 0
    %891 = vmatpush.bf16.msra.mxu0 0
    %892 = vmatpush.bf16.msra.mxu0 0
    %893 = vmatpush.bf16.msra.mxu0 0
    %894 = vmatpush.bf16.msra.mxu0 0
    %895 = vmatpush.bf16.msra.mxu0 %v886
    %896 = vmatmul.bf16.gmra.mxu0 %v883
    %v897 = vpop.f32.mrf.mxu0
    %v898 = vadd.f32 0.0, %v897
    %v899 = vpop.f32.mrf.mxu0
    %900 = vdwg.mxu0
    %v901 = vpack.c.bf16 %v877, %v877
    %v902 = vpack.c.bf16 %v898, %v898
    %905 = vrot.lane.b32.xlu0 %v901, 20
    %v906 = vpop.permute.xlu0 %905
    %907 = vrot.lane.b32.xlu0 %v902, 20
    %v908 = vpop.permute.xlu0 %907
    %vm911 = vcmask 191648
    %912 = vst.msk [vmem:[#allocation3] sm:$0xf] %vm911, %v906
    %913 = vst.msk [vmem:[#allocation3 + $0x4] sm:$0xf] %vm911, %v908
    %v914 = vld [vmem:[#allocation2] sm:$0xf]
    %v915 = vld [vmem:[#allocation2 + $0x4] sm:$0xf]
    %v917 = vunpack.c.l.b16 %v914
    %v918 = vpack.c.b16 %v917, %v917
    %919 = vrot.lane.b32.xlu0 %v918, 104
    %v920 = vpop.permute.xlu0 %919
    %921 = vrot.lane.b32.xlu0 %v918, 72
    %v922 = vpop.permute.xlu0 %921
    %v924 = vsel %vm132, %v920, 0
    %v927 = vsel %vm132, %v922, 0
    %929 = vmatpush.bf16.xpose.msra.mxu0 0
    %930 = vmatpush.bf16.xpose.msra.mxu0 0
    %931 = vmatpush.bf16.xpose.msra.mxu0 0
    %932 = vmatpush.bf16.xpose.msra.mxu0 0
    %933 = vmatpush.bf16.xpose.msra.mxu0 0
    %934 = vmatpush.bf16.xpose.msra.mxu0 0
    %935 = vmatpush.bf16.xpose.msra.mxu0 0
    %936 = vmatpush.bf16.xpose.msra.mxu0 %v927
    %937 = vmatmul.bf16.gmra.mxu0 %v924
    %v938 = vpop.f32.mrf.mxu0
    %v939 = vadd.f32 %v124, %v938
    %v940 = vpop.f32.mrf.mxu0
    %941 = vdwg.mxu0
    %v943 = vunpack.c.l.b16 %v915
    %v944 = vpack.c.b16 %v943, %v943
    %945 = vrot.lane.b32.xlu0 %v944, 104
    %v946 = vpop.permute.xlu0 %945
    %947 = vrot.lane.b32.xlu0 %v944, 72
    %v948 = vpop.permute.xlu0 %947
    %v950 = vsel %vm132, %v946, 0
    %v953 = vsel %vm132, %v948, 0
    %955 = vmatpush.bf16.xpose.msra.mxu0 0
    %956 = vmatpush.bf16.xpose.msra.mxu0 0
    %957 = vmatpush.bf16.xpose.msra.mxu0 0
    %958 = vmatpush.bf16.xpose.msra.mxu0 0
    %959 = vmatpush.bf16.xpose.msra.mxu0 0
    %960 = vmatpush.bf16.xpose.msra.mxu0 0
    %961 = vmatpush.bf16.xpose.msra.mxu0 0
    %962 = vmatpush.bf16.xpose.msra.mxu0 %v953
    %963 = vmatmul.bf16.gmra.mxu0 %v950
    %v964 = vpop.f32.mrf.mxu0
    %v965 = vadd.f32 %v124, %v964
    %v966 = vpop.f32.mrf.mxu0
    %967 = vdwg.mxu0
    %v968 = vsel %vm176, %v939, -inf
    %969 = vmax.xlane.f32.xlu0 %v968
    %v970 = vpop.xlane.xlu0 %969
    %v971 = vsel %vm176, %v965, -inf
    %972 = vmax.xlane.f32.xlu0 %v971
    %v973 = vpop.xlane.xlu0 %972
    %v974 = vsub.f32 %v939, %v970
    %v975 = vsub.f32 %v965, %v973
    %v976 = vmul.f32 %v974, 1.442695
    %v977 = vpow.pop %v976
    %v978 = vmul.f32 %v975, 1.442695
    %v979 = vpow.pop %v978
    %v980 = vsel %vm176, %v977, 0.0
    %981 = vadd.xlane.f32.xlu0 %v980
    %v982 = vpop.xlane.xlu0 %981
    %v983 = vsel %vm176, %v979, 0.0
    %984 = vadd.xlane.f32.xlu0 %v983
    %v985 = vpop.xlane.xlu0 %984
    %v986 = vrcp.pop %v982
    %v987 = vrcp.pop %v985
    %v988 = vmul.f32 %v977, %v986
    %v989 = vmul.f32 %v979, %v987
    %v990 = vpack.c.bf16 %v988, %v988
    %v991 = vpack.c.bf16 %v989, %v989
    %992 = vrot.lane.b32.xlu0 %v918, 40
    %v993 = vpop.permute.xlu0 %992
    %v995 = vsel %vm176, %v990, 0
    %v998 = vsel %vm206, %v993, 0
    %1000 = vmatpush.bf16.msra.mxu0 0
    %1001 = vmatpush.bf16.msra.mxu0 0
    %1002 = vmatpush.bf16.msra.mxu0 0
    %1003 = vmatpush.bf16.msra.mxu0 0
    %1004 = vmatpush.bf16.msra.mxu0 0
    %1005 = vmatpush.bf16.msra.mxu0 0
    %1006 = vmatpush.bf16.msra.mxu0 0
    %1007 = vmatpush.bf16.msra.mxu0 %v998
    %1008 = vmatmul.bf16.gmra.mxu0 %v995
    %v1009 = vpop.f32.mrf.mxu0
    %v1010 = vadd.f32 0.0, %v1009
    %v1011 = vpop.f32.mrf.mxu0
    %1012 = vdwg.mxu0
    %1013 = vrot.lane.b32.xlu0 %v944, 40
    %v1014 = vpop.permute.xlu0 %1013
    %v1016 = vsel %vm176, %v991, 0
    %v1019 = vsel %vm206, %v1014, 0
    %1021 = vmatpush.bf16.msra.mxu0 0
    %1022 = vmatpush.bf16.msra.mxu0 0
    %1023 = vmatpush.bf16.msra.mxu0 0
    %1024 = vmatpush.bf16.msra.mxu0 0
    %1025 = vmatpush.bf16.msra.mxu0 0
    %1026 = vmatpush.bf16.msra.mxu0 0
    %1027 = vmatpush.bf16.msra.mxu0 0
    %1028 = vmatpush.bf16.msra.mxu0 %v1019
    %1029 = vmatmul.bf16.gmra.mxu0 %v1016
    %v1030 = vpop.f32.mrf.mxu0
    %v1031 = vadd.f32 0.0, %v1030
    %v1032 = vpop.f32.mrf.mxu0
    %1033 = vdwg.mxu0
    %v1034 = vpack.c.bf16 %v1010, %v1010
    %v1035 = vpack.c.bf16 %v1031, %v1031
    %1038 = vrot.lane.b32.xlu0 %v1034, 24
    %v1039 = vpop.permute.xlu0 %1038
    %1040 = vrot.lane.b32.xlu0 %v1035, 24
    %v1041 = vpop.permute.xlu0 %1040
    %vm1044 = vcmask 224448
    %1045 = vst.msk [vmem:[#allocation3] sm:$0xf] %vm1044, %v1039
    %1046 = vst.msk [vmem:[#allocation3 + $0x4] sm:$0xf] %vm1044, %v1041
    %v1047 = vld [vmem:[#allocation2] sm:$0xf]
    %v1048 = vld [vmem:[#allocation2 + $0x4] sm:$0xf]
    %v1050 = vunpack.c.l.b16 %v1047
    %v1051 = vpack.c.b16 %v1050, %v1050
    %1052 = vrot.lane.b32.xlu0 %v1051, 100
    %v1053 = vpop.permute.xlu0 %1052
    %1054 = vrot.lane.b32.xlu0 %v1051, 68
    %v1055 = vpop.permute.xlu0 %1054
    %v1057 = vsel %vm132, %v1053, 0
    %v1060 = vsel %vm132, %v1055, 0
    %1062 = vmatpush.bf16.xpose.msra.mxu0 0
    %1063 = vmatpush.bf16.xpose.msra.mxu0 0
    %1064 = vmatpush.bf16.xpose.msra.mxu0 0
    %1065 = vmatpush.bf16.xpose.msra.mxu0 0
    %1066 = vmatpush.bf16.xpose.msra.mxu0 0
    %1067 = vmatpush.bf16.xpose.msra.mxu0 0
    %1068 = vmatpush.bf16.xpose.msra.mxu0 0
    %1069 = vmatpush.bf16.xpose.msra.mxu0 %v1060
    %1070 = vmatmul.bf16.gmra.mxu0 %v1057
    %v1071 = vpop.f32.mrf.mxu0
    %v1072 = vadd.f32 %v124, %v1071
    %v1073 = vpop.f32.mrf.mxu0
    %1074 = vdwg.mxu0
    %v1076 = vunpack.c.l.b16 %v1048
    %v1077 = vpack.c.b16 %v1076, %v1076
    %1078 = vrot.lane.b32.xlu0 %v1077, 100
    %v1079 = vpop.permute.xlu0 %1078
    %1080 = vrot.lane.b32.xlu0 %v1077, 68
    %v1081 = vpop.permute.xlu0 %1080
    %v1083 = vsel %vm132, %v1079, 0
    %v1086 = vsel %vm132, %v1081, 0
    %1088 = vmatpush.bf16.xpose.msra.mxu0 0
    %1089 = vmatpush.bf16.xpose.msra.mxu0 0
    %1090 = vmatpush.bf16.xpose.msra.mxu0 0
    %1091 = vmatpush.bf16.xpose.msra.mxu0 0
    %1092 = vmatpush.bf16.xpose.msra.mxu0 0
    %1093 = vmatpush.bf16.xpose.msra.mxu0 0
    %1094 = vmatpush.bf16.xpose.msra.mxu0 0
    %1095 = vmatpush.bf16.xpose.msra.mxu0 %v1086
    %1096 = vmatmul.bf16.gmra.mxu0 %v1083
    %v1097 = vpop.f32.mrf.mxu0
    %v1098 = vadd.f32 %v124, %v1097
    %v1099 = vpop.f32.mrf.mxu0
    %1100 = vdwg.mxu0
    %v1101 = vsel %vm176, %v1072, -inf
    %1102 = vmax.xlane.f32.xlu0 %v1101
    %v1103 = vpop.xlane.xlu0 %1102
    %v1104 = vsel %vm176, %v1098, -inf
    %1105 = vmax.xlane.f32.xlu0 %v1104
    %v1106 = vpop.xlane.xlu0 %1105
    %v1107 = vsub.f32 %v1072, %v1103
    %v1108 = vsub.f32 %v1098, %v1106
    %v1109 = vmul.f32 %v1107, 1.442695
    %v1110 = vpow.pop %v1109
    %v1111 = vmul.f32 %v1108, 1.442695
    %v1112 = vpow.pop %v1111
    %v1113 = vsel %vm176, %v1110, 0.0
    %1114 = vadd.xlane.f32.xlu0 %v1113
    %v1115 = vpop.xlane.xlu0 %1114
    %v1116 = vsel %vm176, %v1112, 0.0
    %1117 = vadd.xlane.f32.xlu0 %v1116
    %v1118 = vpop.xlane.xlu0 %1117
    %v1119 = vrcp.pop %v1115
    %v1120 = vrcp.pop %v1118
    %v1121 = vmul.f32 %v1110, %v1119
    %v1122 = vmul.f32 %v1112, %v1120
    %v1123 = vpack.c.bf16 %v1121, %v1121
    %v1124 = vpack.c.bf16 %v1122, %v1122
    %1125 = vrot.lane.b32.xlu0 %v1051, 36
    %v1126 = vpop.permute.xlu0 %1125
    %v1128 = vsel %vm176, %v1123, 0
    %v1131 = vsel %vm206, %v1126, 0
    %1133 = vmatpush.bf16.msra.mxu0 0
    %1134 = vmatpush.bf16.msra.mxu0 0
    %1135 = vmatpush.bf16.msra.mxu0 0
    %1136 = vmatpush.bf16.msra.mxu0 0
    %1137 = vmatpush.bf16.msra.mxu0 0
    %1138 = vmatpush.bf16.msra.mxu0 0
    %1139 = vmatpush.bf16.msra.mxu0 0
    %1140 = vmatpush.bf16.msra.mxu0 %v1131
    %1141 = vmatmul.bf16.gmra.mxu0 %v1128
    %v1142 = vpop.f32.mrf.mxu0
    %v1143 = vadd.f32 0.0, %v1142
    %v1144 = vpop.f32.mrf.mxu0
    %1145 = vdwg.mxu0
    %1146 = vrot.lane.b32.xlu0 %v1077, 36
    %v1147 = vpop.permute.xlu0 %1146
    %v1149 = vsel %vm176, %v1124, 0
    %v1152 = vsel %vm206, %v1147, 0
    %1154 = vmatpush.bf16.msra.mxu0 0
    %1155 = vmatpush.bf16.msra.mxu0 0
    %1156 = vmatpush.bf16.msra.mxu0 0
    %1157 = vmatpush.bf16.msra.mxu0 0
    %1158 = vmatpush.bf16.msra.mxu0 0
    %1159 = vmatpush.bf16.msra.mxu0 0
    %1160 = vmatpush.bf16.msra.mxu0 0
    %1161 = vmatpush.bf16.msra.mxu0 %v1152
    %1162 = vmatmul.bf16.gmra.mxu0 %v1149
    %v1163 = vpop.f32.mrf.mxu0
    %v1164 = vadd.f32 0.0, %v1163
    %v1165 = vpop.f32.mrf.mxu0
    %1166 = vdwg.mxu0
    %v1167 = vpack.c.bf16 %v1143, %v1143
    %v1168 = vpack.c.bf16 %v1164, %v1164
    %1171 = vrot.lane.b32.xlu0 %v1167, 28
    %v1172 = vpop.permute.xlu0 %1171
    %1173 = vrot.lane.b32.xlu0 %v1168, 28
    %v1174 = vpop.permute.xlu0 %1173
    %vm1177 = vcmask 257248
    %1178 = vst.msk [vmem:[#allocation3] sm:$0xf] %vm1177, %v1172
    %1179 = vst.msk [vmem:[#allocation3 + $0x4] sm:$0xf] %vm1177, %v1174
    %v1180 = vld [vmem:[#allocation3] sm:$0xf]
    %v1181 = vld [vmem:[#allocation3 + $0x4] sm:$0xf]
    %v1182 = vld [vmem:[#allocation9] sm:$0xf]
    %v1183 = vld [vmem:[#allocation9 + $0x4] sm:$0xf]
    %v1184 = vld [vmem:[#allocation9 + $0x8] sm:$0xf]
    %v1185 = vld [vmem:[#allocation9 + $0xc] sm:$0xf]
    %v1186 = vld [vmem:[%s4] sm:$0x1]
    %v1188 = vperm.slane %v1186, 0
    %v1192 = vunpack.c.l.b16 %v1180
    %v1193 = vunpack.c.l.b16 %v1181
    %v1194 = vpack.c.b16 %v1193, %v1192
    %v1199 = vunpack.c.l.b16 %v1182
    %v1200 = vunpack.c.l.b16 %v1183
    %v1201 = vunpack.c.l.b16 %v1184
    %v1202 = vunpack.c.l.b16 %v1185
    %v1203 = vpack.c.b16 %v1200, %v1199
    %v1204 = vpack.c.b16 %v1202, %v1201
    %v1208 = vsel %vm96, %v1194, 0
    %1210 = vmatpush.bf16.msra.mxu0 0
    %1211 = vmatpush.bf16.msra.mxu0 0
    %1212 = vmatpush.bf16.msra.mxu0 0
    %1213 = vmatpush.bf16.msra.mxu0 0
    %1214 = vmatpush.bf16.msra.mxu0 0
    %1215 = vmatpush.bf16.msra.mxu0 0
    %1216 = vmatpush.bf16.msra.mxu0 %v1204
    %1217 = vmatpush.bf16.msra.mxu0 %v1203
    %1218 = vmatmul.bf16.gmra.mxu0 %v1208
    %v1219 = vpop.f32.mrf.mxu0
    %v1220 = vadd.f32 %v1188, %v1219
    %v1221 = vpop.f32.mrf.mxu0
    %v1222 = vadd.f32 %v1188, %v1221
    %1223 = vdwg.mxu0
    %1224 = vst.msk [vmem:[#allocation10] sm:$0xff] %vm96, %v1220
    %1225 = vst.msk [vmem:[#allocation10 + $0x8] sm:$0xff] %vm96, %v1222
    // Predicated region
    $region34: #{tpu_custom_call.1} parent=1 // pred_check
      _
    $region35: #{tpu_custom_call.1} parent=1 // pred_check_branch
      %1227 = sbr.rel (0) target = $region37
    $region36: #{tpu_custom_call.1} parent=1 // pred_region
      %1229 = vsyncadd [#allocation6], 0
      %s1230 = sshll.u32 [#allocation10], 4
      %s1231 = int_to_ptr.vmem [resolvable:$true] %s1230
      %s1232 = sshll.u32 %s5, 4
      %s1233 = int_to_ptr.hbm [resolvable:$true] %s1232
      %1238 = dma.vmem_to_hbm [thread:$0]  %s1231, 256, %s1233, [#allocation6], 128, 128, 8
    $region37: #{tpu_custom_call.1} parent=1 // pred_fallthru
      _
    // Predicated region
    $region38: #{tpu_custom_call.1} parent=1 // pred_check
      _
    $region39: #{tpu_custom_call.1} parent=1 // pred_check_branch
      %1240 = sbr.rel (0) target = $region41
    $region40: #{tpu_custom_call.1} parent=1 // pred_region
      %1242 = dma.done [#allocation6], 256
    $region41: #{tpu_custom_call.1} parent=1 // pred_fallthru
      _
    %1243 = vsyncpa [#allocation5], 1
    %1244 = vsyncpa [#allocation8], 1
    %1245 = vsyncpa [#allocation6], 1

</llo_original>
